<compile_context>
chip_gen: v6e
topology: v6e:2x2x1
jax: 0.10.0
libtpu: 0.0.40
codegen_flags: <defaults>
</compile_context>

<pallas_src>
import functools

import jax
import jax.numpy as jnp
from jax import lax
from jax.experimental import pallas as pl
from jax.experimental.pallas import tpu as pltpu


def _cross_att_kernel(m_ref, x_ref, wq_ref, wk_ref, wv_ref, wo_ref, b_ref,
                      out_ref, q_sc, m_sc, l_sc, acc_sc, *, heads, dim_heads):
    j = pl.program_id(1)
    n_kv = pl.num_programs(1)

    @pl.when(j == 0)
    def _init():
        # Q projection once per query tile; the 1/sqrt(dim_heads) scale was
        # folded into wq at weight-prep time, so no per-score multiply here.
        q_sc[...] = jnp.dot(m_ref[...], wq_ref[...],
                            preferred_element_type=jnp.float32)
        m_sc[...] = jnp.full_like(m_sc, -jnp.inf)
        l_sc[...] = jnp.zeros_like(l_sc)
        acc_sc[...] = jnp.zeros_like(acc_sc)

    # K/V projections for this key/value tile: wide, lane-dense MXU matmuls
    # (N = inner_dim covers all heads at once).
    k = jnp.dot(x_ref[...], wk_ref[...], preferred_element_type=jnp.float32)  # (tk, inner)
    v = jnp.dot(x_ref[...], wv_ref[...], preferred_element_type=jnp.float32)  # (tk, inner)
    q = q_sc[...]                                                             # (tq, inner)

    # Per-head online-softmax update, statically unrolled (heads is a small
    # trace-time constant) so the LLO scheduler can interleave the heads' work.
    for h in range(heads):
        sl = slice(h * dim_heads, (h + 1) * dim_heads)
        qh = q[:, sl]                                    # (tq, dh)
        kh = k[:, sl]                                    # (tk, dh)
        vh = v[:, sl]                                    # (tk, dh)
        # Contract last dims of both operands: MXU consumes kh un-transposed.
        sim = lax.dot_general(qh, kh, (((1,), (1,)), ((), ())),
                              preferred_element_type=jnp.float32)  # (tq, tk)

        m_old = m_sc[:, h:h + 1]                         # (tq, 1)
        l_old = l_sc[:, h:h + 1]
        m_new = jnp.maximum(m_old, jnp.max(sim, axis=-1, keepdims=True))
        alpha = jnp.exp(m_old - m_new)
        p = jnp.exp(sim - m_new)
        l_sc[:, h:h + 1] = alpha * l_old + jnp.sum(p, axis=-1, keepdims=True)
        acc_sc[:, sl] = alpha * acc_sc[:, sl] + jnp.dot(
            p, vh, preferred_element_type=jnp.float32)
        m_sc[:, h:h + 1] = m_new

    @pl.when(j == n_kv - 1)
    def _finalize():
        # Per-head normalization (EUP reciprocal -> effectively free slot),
        # concat heads along lanes, then ONE wide output projection
        # (K = inner_dim) with the bias folded into the single final store.
        inv_l = pl.reciprocal(l_sc[...], approx=True)    # (tq, heads)
        acc = acc_sc[...]                                # (tq, inner)
        o_parts = [acc[:, h * dim_heads:(h + 1) * dim_heads] * inv_l[:, h:h + 1]
                   for h in range(heads)]
        o_all = jnp.concatenate(o_parts, axis=-1)        # (tq, inner)
        out_ref[...] = (jnp.dot(o_all, wo_ref[...],
                                preferred_element_type=jnp.float32)
                        + b_ref[...])


def prepare_cross_att_weights(Wq, Wkv, Wo, bo, *, heads, dim_heads):
    """One-time (model-load) re-layout of the PyTorch Linear weights.

    Wq : (inner_dim, M_dim)     to_q weight  (no bias)
    Wkv: (2*inner_dim, X_dim)   to_kv weight (no bias)
    Wo : (M_dim, inner_dim)     mutl_heads weight
    bo : (M_dim,)               mutl_heads bias

    The softmax scale 1/sqrt(dim_heads) is folded into Wq here (scalar factor
    applied before the softmax -> mathematically identical, zero runtime cost).
    """
    inner_dim = heads * dim_heads
    scale = float(dim_heads) ** -0.5
    wq_all = Wq.T * scale                         # (M_dim, inner_dim), pre-scaled
    wkv_t = Wkv.T                                 # (X_dim, 2*inner_dim)
    wk_all = wkv_t[:, :inner_dim]                 # (X_dim, inner_dim)
    wv_all = wkv_t[:, inner_dim:]                 # (X_dim, inner_dim)
    wo_all = Wo.T                                 # (inner_dim, M_dim)
    b_row = bo.reshape(1, -1)                     # (1, M_dim)
    return wq_all, wk_all, wv_all, wo_all, b_row


def cross_att_pallas(M, X, wq_all, wk_all, wv_all, wo_all, b_row, *,
                     heads, dim_heads, q_tile=256, kv_tile=512):
    """Pallas forward pass of cross_att (weights already prepared)."""
    n_m, M_dim = M.shape
    n_x, X_dim = X.shape
    inner_dim = heads * dim_heads

    # Query-row tiles ("parallel" -> shards across TensorCores on v7x) and
    # key/value tiles ("arbitrary" reduction axis for the online softmax).
    # Fall back to a single full tile when the size doesn't divide evenly.
    tq = min(q_tile, n_m)
    if n_m % tq != 0:
        tq = n_m
    tk = min(kv_tile, n_x)
    if n_x % tk != 0:
        tk = n_x
    grid = (n_m // tq, n_x // tk)

    kernel = functools.partial(_cross_att_kernel, heads=heads,
                               dim_heads=dim_heads)

    return pl.pallas_call(
        kernel,
        out_shape=jax.ShapeDtypeStruct((n_m, M_dim), jnp.float32),
        grid=grid,
        in_specs=[
            pl.BlockSpec((tq, M_dim), lambda i, j: (i, 0)),          # M (query tile)
            pl.BlockSpec((tk, X_dim), lambda i, j: (j, 0)),          # X (kv tile)
            pl.BlockSpec((M_dim, inner_dim), lambda i, j: (0, 0)),   # Wq (pre-scaled)
            pl.BlockSpec((X_dim, inner_dim), lambda i, j: (0, 0)),   # Wk (all heads)
            pl.BlockSpec((X_dim, inner_dim), lambda i, j: (0, 0)),   # Wv (all heads)
            pl.BlockSpec((inner_dim, M_dim), lambda i, j: (0, 0)),   # Wo (all heads)
            pl.BlockSpec((1, M_dim), lambda i, j: (0, 0)),           # bias row
        ],
        out_specs=pl.BlockSpec((tq, M_dim), lambda i, j: (i, 0)),
        scratch_shapes=[
            pltpu.VMEM((tq, inner_dim), jnp.float32),   # q (per query tile)
            pltpu.VMEM((tq, heads), jnp.float32),       # running max  (per head)
            pltpu.VMEM((tq, heads), jnp.float32),       # running sum  (per head)
            pltpu.VMEM((tq, inner_dim), jnp.float32),   # output accumulator
        ],
        compiler_params=pltpu.CompilerParams(
            dimension_semantics=("parallel", "arbitrary"),
        ),
    )(M, X, wq_all, wk_all, wv_all, wo_all, b_row)


def cross_att_reference(M, X, Wq, Wkv, Wo, bo, *, heads, dim_heads):
    """Plain-JAX reference matching the PyTorch forward exactly."""
    inner_dim = heads * dim_heads
    q = M @ Wq.T                                   # (n_m, inner_dim)
    kv = X @ Wkv.T                                 # (n_x, 2*inner_dim)
    k, v = kv[:, :inner_dim], kv[:, inner_dim:]

    def split(t):  # 'n (h d) -> h n d'
        return t.reshape(t.shape[0], heads, dim_heads).transpose(1, 0, 2)

    qh, kh, vh = split(q), split(k), split(v)
    sim = jnp.einsum('hid,hjd->hij', qh, kh) * (dim_heads ** -0.5)
    p = jax.nn.softmax(sim, axis=-1)
    oh = jnp.einsum('hij,hjd->hid', p, vh)         # (h, n_m, d)
    o = oh.transpose(1, 0, 2).reshape(M.shape[0], inner_dim)   # 'h n d -> n (h d)'
    return o @ Wo.T + bo


if __name__ == "__main__":
    # Small deterministic problem.
    n_m, M_dim = 8, 32           # latent tokens
    n_x, X_dim = 16, 32          # input tokens
    heads, dim_heads = 4, 8
    inner_dim = heads * dim_heads

    key = jax.random.PRNGKey(0)
    k1, k2, k3, k4, k5, k6 = jax.random.split(key, 6)

    M = jax.random.normal(k1, (n_m, M_dim), dtype=jnp.float32)
    X = jax.random.normal(k2, (n_x, X_dim), dtype=jnp.float32)

    # PyTorch Linear weight layout: (out_features, in_features).
    Wq = 0.1 * jax.random.normal(k3, (inner_dim, M_dim), dtype=jnp.float32)       # to_q, no bias
    Wkv = 0.1 * jax.random.normal(k4, (2 * inner_dim, X_dim), dtype=jnp.float32)  # to_kv, no bias
    Wo = 0.1 * jax.random.normal(k5, (M_dim, inner_dim), dtype=jnp.float32)       # mutl_heads weight
    bo = 0.1 * jax.random.normal(k6, (M_dim,), dtype=jnp.float32)                 # mutl_heads bias

    # One-time weight re-layout + scale folding (hoisted out of the hot path).
    wq_all, wk_all, wv_all, wo_all, b_row = prepare_cross_att_weights(
        Wq, Wkv, Wo, bo, heads=heads, dim_heads=dim_heads)

    out = cross_att_pallas(M, X, wq_all, wk_all, wv_all, wo_all, b_row,
                           heads=heads, dim_heads=dim_heads)
    out = jax.block_until_ready(out)

    ref = cross_att_reference(M, X, Wq, Wkv, Wo, bo, heads=heads, dim_heads=dim_heads)
    assert out.shape == (n_m, M_dim)
    # Slightly relaxed tolerance: softmax denominator uses the EUP approximate
    # reciprocal (pl.reciprocal(approx=True)) and the scale is folded into Wq.
    assert jnp.allclose(out, ref, atol=2e-3, rtol=2e-3), "mismatch vs reference"

    print("KERNEL_OK")
</pallas_src>

<mosaic_0001>
module attributes {stable_mosaic.version = 11 : i64} {
  func.func @_cross_att_kernel(%arg0: i32, %arg1: i32, %arg2: memref<8x32xf32, #tpu.memory_space<vmem>>, %arg3: memref<16x32xf32, #tpu.memory_space<vmem>>, %arg4: memref<32x32xf32, #tpu.memory_space<vmem>>, %arg5: memref<32x32xf32, #tpu.memory_space<vmem>>, %arg6: memref<32x32xf32, #tpu.memory_space<vmem>>, %arg7: memref<32x32xf32, #tpu.memory_space<vmem>>, %arg8: memref<1x32xf32, #tpu.memory_space<vmem>>, %arg9: memref<8x32xf32, #tpu.memory_space<vmem>>, %arg10: memref<8x32xf32, #tpu.memory_space<vmem>>, %arg11: memref<8x4xf32, #tpu.memory_space<vmem>>, %arg12: memref<8x4xf32, #tpu.memory_space<vmem>>, %arg13: memref<8x32xf32, #tpu.memory_space<vmem>>) attributes {dimension_semantics = [#tpu.dimension_semantics<parallel>, #tpu.dimension_semantics<arbitrary>], iteration_bounds = array<i64: 1, 1>, scalar_prefetch = 0 : i64, scratch_operands = 4 : i64, tpu.core_type = #tpu.core_type<tc>, window_params = [{transform_indices = @transform_0, window_bounds = array<i64: 8, 32>}, {transform_indices = @transform_1, window_bounds = array<i64: 16, 32>}, {pipeline_mode = #tpu.pipeline_mode<synchronous>, transform_indices = @transform_2, window_bounds = array<i64: 32, 32>}, {pipeline_mode = #tpu.pipeline_mode<synchronous>, transform_indices = @transform_3, window_bounds = array<i64: 32, 32>}, {pipeline_mode = #tpu.pipeline_mode<synchronous>, transform_indices = @transform_4, window_bounds = array<i64: 32, 32>}, {pipeline_mode = #tpu.pipeline_mode<synchronous>, transform_indices = @transform_5, window_bounds = array<i64: 32, 32>}, {pipeline_mode = #tpu.pipeline_mode<synchronous>, transform_indices = @transform_6, window_bounds = array<i64: 1, 32>}, {transform_indices = @transform_7, window_bounds = array<i64: 8, 32>}]} {
    %c0_i32 = arith.constant 0 : i32
    %0 = arith.cmpi eq, %arg1, %c0_i32 : i32
    %1 = arith.extui %0 : i1 to i32
    %c0_i32_0 = arith.constant 0 : i32
    %2 = arith.cmpi ne, %1, %c0_i32_0 : i32
    scf.if %2 {
      %c0_71 = arith.constant 0 : index
      %c0_72 = arith.constant 0 : index
      %117 = vector.load %arg2[%c0_71, %c0_72] : memref<8x32xf32, #tpu.memory_space<vmem>>, vector<8x32xf32>
      %c0_73 = arith.constant 0 : index
      %c0_74 = arith.constant 0 : index
      %118 = vector.load %arg4[%c0_73, %c0_74] : memref<32x32xf32, #tpu.memory_space<vmem>>, vector<32x32xf32>
      %cst_75 = arith.constant dense<0.000000e+00> : vector<8x32xf32>
      %119 = tpu.matmul %117, %118, %cst_75 {dimension_numbers = #tpu.dot_dimension_numbers<[1], [0], [0], [1], [0, 0, 1, 1], [], []>} : vector<8x32xf32>, vector<32x32xf32>, vector<8x32xf32> -> vector<8x32xf32>
      %c0_76 = arith.constant 0 : index
      %c0_77 = arith.constant 0 : index
      %120 = vector.load %arg10[%c0_76, %c0_77] : memref<8x32xf32, #tpu.memory_space<vmem>>, vector<8x32xf32>
      tpu.vector_store %arg10[%c0_76, %c0_77], %119 {strides = array<i32>} : memref<8x32xf32, #tpu.memory_space<vmem>>, vector<8x32xf32>,
      %cst_78 = arith.constant 0xFF800000 : f32
      %121 = vector.broadcast %cst_78 : f32 to vector<8x4xf32>
      %c0_79 = arith.constant 0 : index
      %c0_80 = arith.constant 0 : index
      %122 = vector.load %arg11[%c0_79, %c0_80] : memref<8x4xf32, #tpu.memory_space<vmem>>, vector<8x4xf32>
      tpu.vector_store %arg11[%c0_79, %c0_80], %121 {strides = array<i32>} : memref<8x4xf32, #tpu.memory_space<vmem>>, vector<8x4xf32>,
      %cst_81 = arith.constant 0.000000e+00 : f32
      %123 = vector.broadcast %cst_81 : f32 to vector<8x4xf32>
      %c0_82 = arith.constant 0 : index
      %c0_83 = arith.constant 0 : index
      %124 = vector.load %arg12[%c0_82, %c0_83] : memref<8x4xf32, #tpu.memory_space<vmem>>, vector<8x4xf32>
      tpu.vector_store %arg12[%c0_82, %c0_83], %123 {strides = array<i32>} : memref<8x4xf32, #tpu.memory_space<vmem>>, vector<8x4xf32>,
      %cst_84 = arith.constant 0.000000e+00 : f32
      %125 = vector.broadcast %cst_84 : f32 to vector<8x32xf32>
      %c0_85 = arith.constant 0 : index
      %c0_86 = arith.constant 0 : index
      %126 = vector.load %arg13[%c0_85, %c0_86] : memref<8x32xf32, #tpu.memory_space<vmem>>, vector<8x32xf32>
      tpu.vector_store %arg13[%c0_85, %c0_86], %125 {strides = array<i32>} : memref<8x32xf32, #tpu.memory_space<vmem>>, vector<8x32xf32>,
    } else {
    }
    %c0 = arith.constant 0 : index
    %c0_1 = arith.constant 0 : index
    %3 = vector.load %arg3[%c0, %c0_1] : memref<16x32xf32, #tpu.memory_space<vmem>>, vector<16x32xf32>
    %c0_2 = arith.constant 0 : index
    %c0_3 = arith.constant 0 : index
    %4 = vector.load %arg5[%c0_2, %c0_3] : memref<32x32xf32, #tpu.memory_space<vmem>>, vector<32x32xf32>
    %cst = arith.constant dense<0.000000e+00> : vector<16x32xf32>
    %5 = tpu.matmul %3, %4, %cst {dimension_numbers = #tpu.dot_dimension_numbers<[1], [0], [0], [1], [0, 0, 1, 1], [], []>} : vector<16x32xf32>, vector<32x32xf32>, vector<16x32xf32> -> vector<16x32xf32>
    %c0_4 = arith.constant 0 : index
    %c0_5 = arith.constant 0 : index
    %6 = vector.load %arg3[%c0_4, %c0_5] : memref<16x32xf32, #tpu.memory_space<vmem>>, vector<16x32xf32>
    %c0_6 = arith.constant 0 : index
    %c0_7 = arith.constant 0 : index
    %7 = vector.load %arg6[%c0_6, %c0_7] : memref<32x32xf32, #tpu.memory_space<vmem>>, vector<32x32xf32>
    %cst_8 = arith.constant dense<0.000000e+00> : vector<16x32xf32>
    %8 = tpu.matmul %6, %7, %cst_8 {dimension_numbers = #tpu.dot_dimension_numbers<[1], [0], [0], [1], [0, 0, 1, 1], [], []>} : vector<16x32xf32>, vector<32x32xf32>, vector<16x32xf32> -> vector<16x32xf32>
    %c0_9 = arith.constant 0 : index
    %c0_10 = arith.constant 0 : index
    %9 = vector.load %arg10[%c0_9, %c0_10] : memref<8x32xf32, #tpu.memory_space<vmem>>, vector<8x32xf32>
    %10 = vector.extract_strided_slice %9 {offsets = [0, 0], sizes = [8, 8], strides = [1, 1]} : vector<8x32xf32> to vector<8x8xf32>
    %11 = vector.extract_strided_slice %5 {offsets = [0, 0], sizes = [16, 8], strides = [1, 1]} : vector<16x32xf32> to vector<16x8xf32>
    %12 = vector.extract_strided_slice %8 {offsets = [0, 0], sizes = [16, 8], strides = [1, 1]} : vector<16x32xf32> to vector<16x8xf32>
    %cst_11 = arith.constant dense<0.000000e+00> : vector<8x16xf32>
    %13 = tpu.matmul %10, %11, %cst_11 {dimension_numbers = #tpu.dot_dimension_numbers<[1], [1], [0], [0], [0, 0, 1, 0], [], []>} : vector<8x8xf32>, vector<16x8xf32>, vector<8x16xf32> -> vector<8x16xf32>
    %c0_12 = arith.constant 0 : index
    %c0_13 = arith.constant 0 : index
    %14 = vector.load %arg11[%c0_12, %c0_13] : memref<8x4xf32, #tpu.memory_space<vmem>>, vector<8x1xf32>
    %c0_14 = arith.constant 0 : index
    %c0_15 = arith.constant 0 : index
    %15 = vector.load %arg12[%c0_14, %c0_15] : memref<8x4xf32, #tpu.memory_space<vmem>>, vector<8x1xf32>
    %cst_16 = arith.constant dense<0xFF800000> : vector<8xf32>
    %16 = vector.multi_reduction <maximumf>, %13, %cst_16 [1] : vector<8x16xf32> to vector<8xf32>
    %17 = vector.shape_cast %16 : vector<8xf32> to vector<8x1xf32>
    %18 = arith.maximumf %14, %17 : vector<8x1xf32>
    %19 = arith.subf %14, %18 : vector<8x1xf32>
    %20 = math.exp %19 : vector<8x1xf32>
    %21 = vector.broadcast %18 : vector<8x1xf32> to vector<8x16xf32>
    %22 = arith.subf %13, %21 : vector<8x16xf32>
    %23 = math.exp %22 : vector<8x16xf32>
    %24 = arith.mulf %20, %15 : vector<8x1xf32>
    %cst_17 = arith.constant dense<0.000000e+00> : vector<8xf32>
    %25 = vector.multi_reduction <add>, %23, %cst_17 [1] : vector<8x16xf32> to vector<8xf32>
    %26 = vector.shape_cast %25 : vector<8xf32> to vector<8x1xf32>
    %27 = arith.addf %24, %26 : vector<8x1xf32>
    %c0_18 = arith.constant 0 : index
    %c0_19 = arith.constant 0 : index
    %28 = vector.load %arg12[%c0_18, %c0_19] : memref<8x4xf32, #tpu.memory_space<vmem>>, vector<8x1xf32>
    tpu.vector_store %arg12[%c0_18, %c0_19], %27 {strides = array<i32>} : memref<8x4xf32, #tpu.memory_space<vmem>>, vector<8x1xf32>,
    %c0_20 = arith.constant 0 : index
    %c0_21 = arith.constant 0 : index
    %29 = vector.load %arg13[%c0_20, %c0_21] : memref<8x32xf32, #tpu.memory_space<vmem>>, vector<8x8xf32>
    %30 = vector.broadcast %20 : vector<8x1xf32> to vector<8x8xf32>
    %31 = arith.mulf %30, %29 : vector<8x8xf32>
    %cst_22 = arith.constant dense<0.000000e+00> : vector<8x8xf32>
    %32 = tpu.matmul %23, %12, %cst_22 {dimension_numbers = #tpu.dot_dimension_numbers<[1], [0], [0], [1], [0, 0, 1, 1], [], []>} : vector<8x16xf32>, vector<16x8xf32>, vector<8x8xf32> -> vector<8x8xf32>
    %33 = arith.addf %31, %32 : vector<8x8xf32>
    %c0_23 = arith.constant 0 : index
    %c0_24 = arith.constant 0 : index
    %34 = vector.load %arg13[%c0_23, %c0_24] : memref<8x32xf32, #tpu.memory_space<vmem>>, vector<8x8xf32>
    tpu.vector_store %arg13[%c0_23, %c0_24], %33 {strides = array<i32>} : memref<8x32xf32, #tpu.memory_space<vmem>>, vector<8x8xf32>,
    %c0_25 = arith.constant 0 : index
    %c0_26 = arith.constant 0 : index
    %35 = vector.load %arg11[%c0_25, %c0_26] : memref<8x4xf32, #tpu.memory_space<vmem>>, vector<8x1xf32>
    tpu.vector_store %arg11[%c0_25, %c0_26], %18 {strides = array<i32>} : memref<8x4xf32, #tpu.memory_space<vmem>>, vector<8x1xf32>,
    %36 = vector.extract_strided_slice %9 {offsets = [0, 8], sizes = [8, 8], strides = [1, 1]} : vector<8x32xf32> to vector<8x8xf32>
    %37 = vector.extract_strided_slice %5 {offsets = [0, 8], sizes = [16, 8], strides = [1, 1]} : vector<16x32xf32> to vector<16x8xf32>
    %38 = vector.extract_strided_slice %8 {offsets = [0, 8], sizes = [16, 8], strides = [1, 1]} : vector<16x32xf32> to vector<16x8xf32>
    %cst_27 = arith.constant dense<0.000000e+00> : vector<8x16xf32>
    %39 = tpu.matmul %36, %37, %cst_27 {dimension_numbers = #tpu.dot_dimension_numbers<[1], [1], [0], [0], [0, 0, 1, 0], [], []>} : vector<8x8xf32>, vector<16x8xf32>, vector<8x16xf32> -> vector<8x16xf32>
    %c0_28 = arith.constant 0 : index
    %c1 = arith.constant 1 : index
    %40 = vector.load %arg11[%c0_28, %c1] : memref<8x4xf32, #tpu.memory_space<vmem>>, vector<8x1xf32>
    %c0_29 = arith.constant 0 : index
    %c1_30 = arith.constant 1 : index
    %41 = vector.load %arg12[%c0_29, %c1_30] : memref<8x4xf32, #tpu.memory_space<vmem>>, vector<8x1xf32>
    %cst_31 = arith.constant dense<0xFF800000> : vector<8xf32>
    %42 = vector.multi_reduction <maximumf>, %39, %cst_31 [1] : vector<8x16xf32> to vector<8xf32>
    %43 = vector.shape_cast %42 : vector<8xf32> to vector<8x1xf32>
    %44 = arith.maximumf %40, %43 : vector<8x1xf32>
    %45 = arith.subf %40, %44 : vector<8x1xf32>
    %46 = math.exp %45 : vector<8x1xf32>
    %47 = vector.broadcast %44 : vector<8x1xf32> to vector<8x16xf32>
    %48 = arith.subf %39, %47 : vector<8x16xf32>
    %49 = math.exp %48 : vector<8x16xf32>
    %50 = arith.mulf %46, %41 : vector<8x1xf32>
    %cst_32 = arith.constant dense<0.000000e+00> : vector<8xf32>
    %51 = vector.multi_reduction <add>, %49, %cst_32 [1] : vector<8x16xf32> to vector<8xf32>
    %52 = vector.shape_cast %51 : vector<8xf32> to vector<8x1xf32>
    %53 = arith.addf %50, %52 : vector<8x1xf32>
    %c0_33 = arith.constant 0 : index
    %c1_34 = arith.constant 1 : index
    %54 = vector.load %arg12[%c0_33, %c1_34] : memref<8x4xf32, #tpu.memory_space<vmem>>, vector<8x1xf32>
    tpu.vector_store %arg12[%c0_33, %c1_34], %53 {strides = array<i32>} : memref<8x4xf32, #tpu.memory_space<vmem>>, vector<8x1xf32>,
    %c0_35 = arith.constant 0 : index
    %c8 = arith.constant 8 : index
    %55 = vector.load %arg13[%c0_35, %c8] : memref<8x32xf32, #tpu.memory_space<vmem>>, vector<8x8xf32>
    %56 = vector.broadcast %46 : vector<8x1xf32> to vector<8x8xf32>
    %57 = arith.mulf %56, %55 : vector<8x8xf32>
    %cst_36 = arith.constant dense<0.000000e+00> : vector<8x8xf32>
    %58 = tpu.matmul %49, %38, %cst_36 {dimension_numbers = #tpu.dot_dimension_numbers<[1], [0], [0], [1], [0, 0, 1, 1], [], []>} : vector<8x16xf32>, vector<16x8xf32>, vector<8x8xf32> -> vector<8x8xf32>
    %59 = arith.addf %57, %58 : vector<8x8xf32>
    %c0_37 = arith.constant 0 : index
    %c8_38 = arith.constant 8 : index
    %60 = vector.load %arg13[%c0_37, %c8_38] : memref<8x32xf32, #tpu.memory_space<vmem>>, vector<8x8xf32>
    tpu.vector_store %arg13[%c0_37, %c8_38], %59 {strides = array<i32>} : memref<8x32xf32, #tpu.memory_space<vmem>>, vector<8x8xf32>,
    %c0_39 = arith.constant 0 : index
    %c1_40 = arith.constant 1 : index
    %61 = vector.load %arg11[%c0_39, %c1_40] : memref<8x4xf32, #tpu.memory_space<vmem>>, vector<8x1xf32>
    tpu.vector_store %arg11[%c0_39, %c1_40], %44 {strides = array<i32>} : memref<8x4xf32, #tpu.memory_space<vmem>>, vector<8x1xf32>,
    %62 = vector.extract_strided_slice %9 {offsets = [0, 16], sizes = [8, 8], strides = [1, 1]} : vector<8x32xf32> to vector<8x8xf32>
    %63 = vector.extract_strided_slice %5 {offsets = [0, 16], sizes = [16, 8], strides = [1, 1]} : vector<16x32xf32> to vector<16x8xf32>
    %64 = vector.extract_strided_slice %8 {offsets = [0, 16], sizes = [16, 8], strides = [1, 1]} : vector<16x32xf32> to vector<16x8xf32>
    %cst_41 = arith.constant dense<0.000000e+00> : vector<8x16xf32>
    %65 = tpu.matmul %62, %63, %cst_41 {dimension_numbers = #tpu.dot_dimension_numbers<[1], [1], [0], [0], [0, 0, 1, 0], [], []>} : vector<8x8xf32>, vector<16x8xf32>, vector<8x16xf32> -> vector<8x16xf32>
    %c0_42 = arith.constant 0 : index
    %c2 = arith.constant 2 : index
    %66 = vector.load %arg11[%c0_42, %c2] : memref<8x4xf32, #tpu.memory_space<vmem>>, vector<8x1xf32>
    %c0_43 = arith.constant 0 : index
    %c2_44 = arith.constant 2 : index
    %67 = vector.load %arg12[%c0_43, %c2_44] : memref<8x4xf32, #tpu.memory_space<vmem>>, vector<8x1xf32>
    %cst_45 = arith.constant dense<0xFF800000> : vector<8xf32>
    %68 = vector.multi_reduction <maximumf>, %65, %cst_45 [1] : vector<8x16xf32> to vector<8xf32>
    %69 = vector.shape_cast %68 : vector<8xf32> to vector<8x1xf32>
    %70 = arith.maximumf %66, %69 : vector<8x1xf32>
    %71 = arith.subf %66, %70 : vector<8x1xf32>
    %72 = math.exp %71 : vector<8x1xf32>
    %73 = vector.broadcast %70 : vector<8x1xf32> to vector<8x16xf32>
    %74 = arith.subf %65, %73 : vector<8x16xf32>
    %75 = math.exp %74 : vector<8x16xf32>
    %76 = arith.mulf %72, %67 : vector<8x1xf32>
    %cst_46 = arith.constant dense<0.000000e+00> : vector<8xf32>
    %77 = vector.multi_reduction <add>, %75, %cst_46 [1] : vector<8x16xf32> to vector<8xf32>
    %78 = vector.shape_cast %77 : vector<8xf32> to vector<8x1xf32>
    %79 = arith.addf %76, %78 : vector<8x1xf32>
    %c0_47 = arith.constant 0 : index
    %c2_48 = arith.constant 2 : index
    %80 = vector.load %arg12[%c0_47, %c2_48] : memref<8x4xf32, #tpu.memory_space<vmem>>, vector<8x1xf32>
    tpu.vector_store %arg12[%c0_47, %c2_48], %79 {strides = array<i32>} : memref<8x4xf32, #tpu.memory_space<vmem>>, vector<8x1xf32>,
    %c0_49 = arith.constant 0 : index
    %c16 = arith.constant 16 : index
    %81 = vector.load %arg13[%c0_49, %c16] : memref<8x32xf32, #tpu.memory_space<vmem>>, vector<8x8xf32>
    %82 = vector.broadcast %72 : vector<8x1xf32> to vector<8x8xf32>
    %83 = arith.mulf %82, %81 : vector<8x8xf32>
    %cst_50 = arith.constant dense<0.000000e+00> : vector<8x8xf32>
    %84 = tpu.matmul %75, %64, %cst_50 {dimension_numbers = #tpu.dot_dimension_numbers<[1], [0], [0], [1], [0, 0, 1, 1], [], []>} : vector<8x16xf32>, vector<16x8xf32>, vector<8x8xf32> -> vector<8x8xf32>
    %85 = arith.addf %83, %84 : vector<8x8xf32>
    %c0_51 = arith.constant 0 : index
    %c16_52 = arith.constant 16 : index
    %86 = vector.load %arg13[%c0_51, %c16_52] : memref<8x32xf32, #tpu.memory_space<vmem>>, vector<8x8xf32>
    tpu.vector_store %arg13[%c0_51, %c16_52], %85 {strides = array<i32>} : memref<8x32xf32, #tpu.memory_space<vmem>>, vector<8x8xf32>,
    %c0_53 = arith.constant 0 : index
    %c2_54 = arith.constant 2 : index
    %87 = vector.load %arg11[%c0_53, %c2_54] : memref<8x4xf32, #tpu.memory_space<vmem>>, vector<8x1xf32>
    tpu.vector_store %arg11[%c0_53, %c2_54], %70 {strides = array<i32>} : memref<8x4xf32, #tpu.memory_space<vmem>>, vector<8x1xf32>,
    %88 = vector.extract_strided_slice %9 {offsets = [0, 24], sizes = [8, 8], strides = [1, 1]} : vector<8x32xf32> to vector<8x8xf32>
    %89 = vector.extract_strided_slice %5 {offsets = [0, 24], sizes = [16, 8], strides = [1, 1]} : vector<16x32xf32> to vector<16x8xf32>
    %90 = vector.extract_strided_slice %8 {offsets = [0, 24], sizes = [16, 8], strides = [1, 1]} : vector<16x32xf32> to vector<16x8xf32>
    %cst_55 = arith.constant dense<0.000000e+00> : vector<8x16xf32>
    %91 = tpu.matmul %88, %89, %cst_55 {dimension_numbers = #tpu.dot_dimension_numbers<[1], [1], [0], [0], [0, 0, 1, 0], [], []>} : vector<8x8xf32>, vector<16x8xf32>, vector<8x16xf32> -> vector<8x16xf32>
    %c0_56 = arith.constant 0 : index
    %c3 = arith.constant 3 : index
    %92 = vector.load %arg11[%c0_56, %c3] : memref<8x4xf32, #tpu.memory_space<vmem>>, vector<8x1xf32>
    %c0_57 = arith.constant 0 : index
    %c3_58 = arith.constant 3 : index
    %93 = vector.load %arg12[%c0_57, %c3_58] : memref<8x4xf32, #tpu.memory_space<vmem>>, vector<8x1xf32>
    %cst_59 = arith.constant dense<0xFF800000> : vector<8xf32>
    %94 = vector.multi_reduction <maximumf>, %91, %cst_59 [1] : vector<8x16xf32> to vector<8xf32>
    %95 = vector.shape_cast %94 : vector<8xf32> to vector<8x1xf32>
    %96 = arith.maximumf %92, %95 : vector<8x1xf32>
    %97 = arith.subf %92, %96 : vector<8x1xf32>
    %98 = math.exp %97 : vector<8x1xf32>
    %99 = vector.broadcast %96 : vector<8x1xf32> to vector<8x16xf32>
    %100 = arith.subf %91, %99 : vector<8x16xf32>
    %101 = math.exp %100 : vector<8x16xf32>
    %102 = arith.mulf %98, %93 : vector<8x1xf32>
    %cst_60 = arith.constant dense<0.000000e+00> : vector<8xf32>
    %103 = vector.multi_reduction <add>, %101, %cst_60 [1] : vector<8x16xf32> to vector<8xf32>
    %104 = vector.shape_cast %103 : vector<8xf32> to vector<8x1xf32>
    %105 = arith.addf %102, %104 : vector<8x1xf32>
    %c0_61 = arith.constant 0 : index
    %c3_62 = arith.constant 3 : index
    %106 = vector.load %arg12[%c0_61, %c3_62] : memref<8x4xf32, #tpu.memory_space<vmem>>, vector<8x1xf32>
    tpu.vector_store %arg12[%c0_61, %c3_62], %105 {strides = array<i32>} : memref<8x4xf32, #tpu.memory_space<vmem>>, vector<8x1xf32>,
    %c0_63 = arith.constant 0 : index
    %c24 = arith.constant 24 : index
    %107 = vector.load %arg13[%c0_63, %c24] : memref<8x32xf32, #tpu.memory_space<vmem>>, vector<8x8xf32>
    %108 = vector.broadcast %98 : vector<8x1xf32> to vector<8x8xf32>
    %109 = arith.mulf %108, %107 : vector<8x8xf32>
    %cst_64 = arith.constant dense<0.000000e+00> : vector<8x8xf32>
    %110 = tpu.matmul %101, %90, %cst_64 {dimension_numbers = #tpu.dot_dimension_numbers<[1], [0], [0], [1], [0, 0, 1, 1], [], []>} : vector<8x16xf32>, vector<16x8xf32>, vector<8x8xf32> -> vector<8x8xf32>
    %111 = arith.addf %109, %110 : vector<8x8xf32>
    %c0_65 = arith.constant 0 : index
    %c24_66 = arith.constant 24 : index
    %112 = vector.load %arg13[%c0_65, %c24_66] : memref<8x32xf32, #tpu.memory_space<vmem>>, vector<8x8xf32>
    tpu.vector_store %arg13[%c0_65, %c24_66], %111 {strides = array<i32>} : memref<8x32xf32, #tpu.memory_space<vmem>>, vector<8x8xf32>,
    %c0_67 = arith.constant 0 : index
    %c3_68 = arith.constant 3 : index
    %113 = vector.load %arg11[%c0_67, %c3_68] : memref<8x4xf32, #tpu.memory_space<vmem>>, vector<8x1xf32>
    tpu.vector_store %arg11[%c0_67, %c3_68], %96 {strides = array<i32>} : memref<8x4xf32, #tpu.memory_space<vmem>>, vector<8x1xf32>,
    %c0_i32_69 = arith.constant 0 : i32
    %114 = arith.cmpi eq, %arg1, %c0_i32_69 : i32
    %115 = arith.extui %114 : i1 to i32
    %c0_i32_70 = arith.constant 0 : i32
    %116 = arith.cmpi ne, %115, %c0_i32_70 : i32
    scf.if %116 {
      %c0_71 = arith.constant 0 : index
      %c0_72 = arith.constant 0 : index
      %117 = vector.load %arg12[%c0_71, %c0_72] : memref<8x4xf32, #tpu.memory_space<vmem>>, vector<8x4xf32>
      %118 = tpu.reciprocal %117 {approx = true} : vector<8x4xf32> -> vector<8x4xf32>
      %c0_73 = arith.constant 0 : index
      %c0_74 = arith.constant 0 : index
      %119 = vector.load %arg13[%c0_73, %c0_74] : memref<8x32xf32, #tpu.memory_space<vmem>>, vector<8x32xf32>
      %120 = vector.extract_strided_slice %119 {offsets = [0, 0], sizes = [8, 8], strides = [1, 1]} : vector<8x32xf32> to vector<8x8xf32>
      %121 = vector.extract_strided_slice %118 {offsets = [0, 0], sizes = [8, 1], strides = [1, 1]} : vector<8x4xf32> to vector<8x1xf32>
      %122 = vector.broadcast %121 : vector<8x1xf32> to vector<8x8xf32>
      %123 = arith.mulf %120, %122 : vector<8x8xf32>
      %124 = vector.extract_strided_slice %119 {offsets = [0, 8], sizes = [8, 8], strides = [1, 1]} : vector<8x32xf32> to vector<8x8xf32>
      %125 = vector.extract_strided_slice %118 {offsets = [0, 1], sizes = [8, 1], strides = [1, 1]} : vector<8x4xf32> to vector<8x1xf32>
      %126 = vector.broadcast %125 : vector<8x1xf32> to vector<8x8xf32>
      %127 = arith.mulf %124, %126 : vector<8x8xf32>
      %128 = vector.extract_strided_slice %119 {offsets = [0, 16], sizes = [8, 8], strides = [1, 1]} : vector<8x32xf32> to vector<8x8xf32>
      %129 = vector.extract_strided_slice %118 {offsets = [0, 2], sizes = [8, 1], strides = [1, 1]} : vector<8x4xf32> to vector<8x1xf32>
      %130 = vector.broadcast %129 : vector<8x1xf32> to vector<8x8xf32>
      %131 = arith.mulf %128, %130 : vector<8x8xf32>
      %132 = vector.extract_strided_slice %119 {offsets = [0, 24], sizes = [8, 8], strides = [1, 1]} : vector<8x32xf32> to vector<8x8xf32>
      %133 = vector.extract_strided_slice %118 {offsets = [0, 3], sizes = [8, 1], strides = [1, 1]} : vector<8x4xf32> to vector<8x1xf32>
      %134 = vector.broadcast %133 : vector<8x1xf32> to vector<8x8xf32>
      %135 = arith.mulf %132, %134 : vector<8x8xf32>
      %136 = tpu.concatenate %123, %127, %131, %135 in 1 : vector<8x8xf32>, vector<8x8xf32>, vector<8x8xf32>, vector<8x8xf32> -> vector<8x32xf32>
      %c0_75 = arith.constant 0 : index
      %c0_76 = arith.constant 0 : index
      %137 = vector.load %arg7[%c0_75, %c0_76] : memref<32x32xf32, #tpu.memory_space<vmem>>, vector<32x32xf32>
      %cst_77 = arith.constant dense<0.000000e+00> : vector<8x32xf32>
      %138 = tpu.matmul %136, %137, %cst_77 {dimension_numbers = #tpu.dot_dimension_numbers<[1], [0], [0], [1], [0, 0, 1, 1], [], []>} : vector<8x32xf32>, vector<32x32xf32>, vector<8x32xf32> -> vector<8x32xf32>
      %c0_78 = arith.constant 0 : index
      %c0_79 = arith.constant 0 : index
      %139 = vector.load %arg8[%c0_78, %c0_79] : memref<1x32xf32, #tpu.memory_space<vmem>>, vector<1x32xf32>
      %140 = vector.broadcast %139 : vector<1x32xf32> to vector<8x32xf32>
      %141 = arith.addf %138, %140 : vector<8x32xf32>
      %c0_80 = arith.constant 0 : index
      %c0_81 = arith.constant 0 : index
      %142 = vector.load %arg9[%c0_80, %c0_81] : memref<8x32xf32, #tpu.memory_space<vmem>>, vector<8x32xf32>
      tpu.vector_store %arg9[%c0_80, %c0_81], %141 {strides = array<i32>} : memref<8x32xf32, #tpu.memory_space<vmem>>, vector<8x32xf32>,
    } else {
    }
    return
  }
  func.func @transform_0(%arg0: i32, %arg1: i32) -> (i32, i32) {
    %c0_i32 = arith.constant 0 : i32
    %c0_i32_0 = arith.constant 0 : i32
    return %arg0, %c0_i32 : i32, i32
  }
  func.func @transform_1(%arg0: i32, %arg1: i32) -> (i32, i32) {
    %c0_i32 = arith.constant 0 : i32
    %c0_i32_0 = arith.constant 0 : i32
    return %arg1, %c0_i32 : i32, i32
  }
  func.func @transform_2(%arg0: i32, %arg1: i32) -> (i32, i32) {
    %c0_i32 = arith.constant 0 : i32
    %c0_i32_0 = arith.constant 0 : i32
    %c0_i32_1 = arith.constant 0 : i32
    return %c0_i32, %c0_i32_0 : i32, i32
  }
  func.func @transform_3(%arg0: i32, %arg1: i32) -> (i32, i32) {
    %c0_i32 = arith.constant 0 : i32
    %c0_i32_0 = arith.constant 0 : i32
    %c0_i32_1 = arith.constant 0 : i32
    return %c0_i32, %c0_i32_0 : i32, i32
  }
  func.func @transform_4(%arg0: i32, %arg1: i32) -> (i32, i32) {
    %c0_i32 = arith.constant 0 : i32
    %c0_i32_0 = arith.constant 0 : i32
    %c0_i32_1 = arith.constant 0 : i32
    return %c0_i32, %c0_i32_0 : i32, i32
  }
  func.func @transform_5(%arg0: i32, %arg1: i32) -> (i32, i32) {
    %c0_i32 = arith.constant 0 : i32
    %c0_i32_0 = arith.constant 0 : i32
    %c0_i32_1 = arith.constant 0 : i32
    return %c0_i32, %c0_i32_0 : i32, i32
  }
  func.func @transform_6(%arg0: i32, %arg1: i32) -> (i32, i32) {
    %c0_i32 = arith.constant 0 : i32
    %c0_i32_0 = arith.constant 0 : i32
    %c0_i32_1 = arith.constant 0 : i32
    return %c0_i32, %c0_i32_0 : i32, i32
  }
  func.func @transform_7(%arg0: i32, %arg1: i32) -> (i32, i32) {
    %c0_i32 = arith.constant 0 : i32
    %c0_i32_0 = arith.constant 0 : i32
    return %arg0, %c0_i32 : i32, i32
  }
}

</mosaic_0001>

<llo_original>
// kernel: tpu_custom_call.1
$region0: #{tpu_custom_call.1}
  #allocation0 [shape = 'u32[]', space=smem, size = 0x4, offset = 0x4, fixed_abs, tag = 'smem constant byte address 0x4 - core index']
  #allocation1 [shape = 'u32[144,128]{1,0:T(1,128)}', space=vmem, size = 0x12000, scoped, tag = 'internal scratch']
  #allocation2 [shape = 'f32[8,32]{1,0:T(8,128)}', space=vmem, size = 0x1000, scoped, tag = 'scratch operand']
  #allocation3 [shape = 'f32[8,4]{1,0:T(8,128)}', space=vmem, size = 0x1000, scoped, tag = 'scratch operand']
  #allocation4 [shape = 'f32[8,4]{1,0:T(8,128)}', space=vmem, size = 0x1000, scoped, tag = 'scratch operand']
  #allocation5 [shape = 'f32[8,32]{1,0:T(8,128)}', space=vmem, size = 0x1000, scoped, tag = 'scratch operand']
  %s0 = inlined_call_operand.hbm [shape: f32[8,32], index: 0, kind: input, shape index: {}]
  %s1 = inlined_call_operand.hbm [shape: f32[16,32], index: 1, kind: input, shape index: {}]
  %s2 = inlined_call_operand.hbm [shape: f32[32,32], index: 2, kind: input, shape index: {}]
  %s3 = inlined_call_operand.hbm [shape: f32[32,32], index: 3, kind: input, shape index: {}]
  %s4 = inlined_call_operand.hbm [shape: f32[32,32], index: 4, kind: input, shape index: {}]
  %s5 = inlined_call_operand.hbm [shape: f32[32,32], index: 5, kind: input, shape index: {}]
  %s6 = inlined_call_operand.vmem [shape: f32[1,32], index: 6, kind: input, shape index: {}]
  %s7 = inlined_call_operand.hbm [shape: f32[8,32], index: 7, kind: output, shape index: {}]
  %s8 = sld [smem:[#allocation0]]
  $region70: #{tpu_custom_call.1} parent=0
    _
  %s10 = ssub.s32 1, %s8
  %s11 = scalar_select 0, %s10, %s8
  $region1: #{tpu_custom_call.1} parent=0
    #allocation6 [shape = 'u8[4096]{0}', space=vmem, size = 0x1000, scoped, tag = 'input window, operand 0, single buffered']
    #allocation7 [shape = 's32[1]{0}', space=sflag, size = 0x4, scoped, tag = 'scoped memory for tpu_custom_call.1']
    #allocation8 [shape = 's32[1]{0}', space=sflag, size = 0x4, scoped, tag = 'scoped memory for tpu_custom_call.1']
    #allocation9 [shape = 'u8[8192]{0}', space=vmem, size = 0x2000, scoped, tag = 'input window, operand 1, single buffered']
    #allocation10 [shape = 's32[1]{0}', space=sflag, size = 0x4, scoped, tag = 'scoped memory for tpu_custom_call.1']
    #allocation11 [shape = 'u8[16384]{0}', space=vmem, size = 0x4000, scoped, tag = 'input window, operand 2, single buffered']
    #allocation12 [shape = 'u8[16384]{0}', space=vmem, size = 0x4000, scoped, tag = 'input window, operand 3, single buffered']
    #allocation13 [shape = 's32[1]{0}', space=sflag, size = 0x4, scoped, tag = 'scoped memory for tpu_custom_call.1']
    #allocation14 [shape = 'u8[16384]{0}', space=vmem, size = 0x4000, scoped, tag = 'input window, operand 4, single buffered']
    #allocation15 [shape = 'u8[16384]{0}', space=vmem, size = 0x4000, scoped, tag = 'input window, operand 5, single buffered']
    #allocation16 [shape = 's32[1]{0}', space=sflag, size = 0x4, scoped, tag = 'scoped memory for tpu_custom_call.1']
    #allocation17 [shape = 'u8[4096]{0}', space=vmem, size = 0x1000, scoped, tag = 'output window, operand 0, single buffered']
    %12 = vsyncpa [#allocation7], 0
    %13 = vsyncpa [#allocation10], 0
    %14 = vsyncpa [#allocation13], 0
    %15 = vsyncpa [#allocation16], 0
    %16 = vsyncpa [#allocation8], 0
    // Predicated region
    $region2: #{tpu_custom_call.1} parent=1 // pred_check
      _
    $region3: #{tpu_custom_call.1} parent=1 // pred_check_branch
      %18 = sbr.rel (0) target = $region5
    $region4: #{tpu_custom_call.1} parent=1 // pred_region
      %s20 = ssub.s32 128, 128
      %21 = vsyncadd [#allocation7], %s20
      %s23 = sshll.u32 [#allocation6], 4
      %s24 = int_to_ptr.vmem [resolvable:$true] %s23
      %26 = dma.hbm_to_vmem [thread:$0]  %s0, 128, %s24, [#allocation7]
    $region5: #{tpu_custom_call.1} parent=1 // pred_fallthru
      _
    // Predicated region
    $region6: #{tpu_custom_call.1} parent=1 // pred_check
      _
    $region7: #{tpu_custom_call.1} parent=1 // pred_check_branch
      %28 = sbr.rel (0) target = $region9
    $region8: #{tpu_custom_call.1} parent=1 // pred_region
      %s30 = ssub.s32 256, 256
      %31 = vsyncadd [#allocation10], %s30
      %s32 = sshll.u32 [#allocation9], 4
      %s33 = int_to_ptr.vmem [resolvable:$true] %s32
      %38 = dma.hbm_to_vmem [thread:$0]  %s1, 256, %s33, [#allocation10], 128, 128, 8
    $region9: #{tpu_custom_call.1} parent=1 // pred_fallthru
      _
    // Predicated region
    $region10: #{tpu_custom_call.1} parent=1 // pred_check
      _
    $region11: #{tpu_custom_call.1} parent=1 // pred_check_branch
      %40 = sbr.rel (0) target = $region13
    $region12: #{tpu_custom_call.1} parent=1 // pred_region
      %s42 = ssub.s32 512, 512
      %43 = vsyncadd [#allocation10], %s42
      %s44 = sshll.u32 [#allocation11], 4
      %s45 = int_to_ptr.vmem [resolvable:$true] %s44
      %50 = dma.hbm_to_vmem [thread:$0]  %s2, 512, %s45, [#allocation10], 128, 128, 8
    $region13: #{tpu_custom_call.1} parent=1 // pred_fallthru
      _
    // Predicated region
    $region14: #{tpu_custom_call.1} parent=1 // pred_check
      _
    $region15: #{tpu_custom_call.1} parent=1 // pred_check_branch
      %52 = sbr.rel (0) target = $region17
    $region16: #{tpu_custom_call.1} parent=1 // pred_region
      %s54 = ssub.s32 512, 512
      %55 = vsyncadd [#allocation13], %s54
      %s56 = sshll.u32 [#allocation12], 4
      %s57 = int_to_ptr.vmem [resolvable:$true] %s56
      %62 = dma.hbm_to_vmem [thread:$0]  %s3, 512, %s57, [#allocation13], 128, 128, 8
    $region17: #{tpu_custom_call.1} parent=1 // pred_fallthru
      _
    // Predicated region
    $region18: #{tpu_custom_call.1} parent=1 // pred_check
      _
    $region19: #{tpu_custom_call.1} parent=1 // pred_check_branch
      %64 = sbr.rel (0) target = $region21
    $region20: #{tpu_custom_call.1} parent=1 // pred_region
      %s66 = ssub.s32 512, 512
      %67 = vsyncadd [#allocation13], %s66
      %s68 = sshll.u32 [#allocation14], 4
      %s69 = int_to_ptr.vmem [resolvable:$true] %s68
      %74 = dma.hbm_to_vmem [thread:$0]  %s4, 512, %s69, [#allocation13], 128, 128, 8
    $region21: #{tpu_custom_call.1} parent=1 // pred_fallthru
      _
    // Predicated region
    $region22: #{tpu_custom_call.1} parent=1 // pred_check
      _
    $region23: #{tpu_custom_call.1} parent=1 // pred_check_branch
      %76 = sbr.rel (0) target = $region25
    $region24: #{tpu_custom_call.1} parent=1 // pred_region
      %s78 = ssub.s32 512, 512
      %79 = vsyncadd [#allocation16], %s78
      %s80 = sshll.u32 [#allocation15], 4
      %s81 = int_to_ptr.vmem [resolvable:$true] %s80
      %86 = dma.hbm_to_vmem [thread:$0]  %s5, 512, %s81, [#allocation16], 128, 128, 8
    $region25: #{tpu_custom_call.1} parent=1 // pred_fallthru
      _
    // Predicated region
    $region26: #{tpu_custom_call.1} parent=1 // pred_check
      _
    $region27: #{tpu_custom_call.1} parent=1 // pred_check_branch
      %88 = sbr.rel (0) target = $region29
    $region28: #{tpu_custom_call.1} parent=1 // pred_region
      _
    $region29: #{tpu_custom_call.1} parent=1 // pred_fallthru
      _
    // Predicated region
    $region30: #{tpu_custom_call.1} parent=1 // pred_check
      _
    $region31: #{tpu_custom_call.1} parent=1 // pred_check_branch
      %90 = sbr.rel (0) target = $region33
    $region32: #{tpu_custom_call.1} parent=1 // pred_region
      %91 = dma.done [#allocation7], 128
    $region33: #{tpu_custom_call.1} parent=1 // pred_fallthru
      _
    // Predicated region
    $region34: #{tpu_custom_call.1} parent=1 // pred_check
      _
    $region35: #{tpu_custom_call.1} parent=1 // pred_check_branch
      %93 = sbr.rel (0) target = $region37
    $region36: #{tpu_custom_call.1} parent=1 // pred_region
      %94 = dma.done [#allocation10], 256
    $region37: #{tpu_custom_call.1} parent=1 // pred_fallthru
      _
    // Predicated region
    $region38: #{tpu_custom_call.1} parent=1 // pred_check
      _
    $region39: #{tpu_custom_call.1} parent=1 // pred_check_branch
      %96 = sbr.rel (0) target = $region41
    $region40: #{tpu_custom_call.1} parent=1 // pred_region
      %97 = dma.done [#allocation10], 512
    $region41: #{tpu_custom_call.1} parent=1 // pred_fallthru
      _
    // Predicated region
    $region42: #{tpu_custom_call.1} parent=1 // pred_check
      _
    $region43: #{tpu_custom_call.1} parent=1 // pred_check_branch
      %99 = sbr.rel (0) target = $region45
    $region44: #{tpu_custom_call.1} parent=1 // pred_region
      %100 = dma.done [#allocation13], 512
    $region45: #{tpu_custom_call.1} parent=1 // pred_fallthru
      _
    // Predicated region
    $region46: #{tpu_custom_call.1} parent=1 // pred_check
      _
    $region47: #{tpu_custom_call.1} parent=1 // pred_check_branch
      %102 = sbr.rel (0) target = $region49
    $region48: #{tpu_custom_call.1} parent=1 // pred_region
      %103 = dma.done [#allocation13], 512
    $region49: #{tpu_custom_call.1} parent=1 // pred_fallthru
      _
    // Predicated region
    $region50: #{tpu_custom_call.1} parent=1 // pred_check
      _
    $region51: #{tpu_custom_call.1} parent=1 // pred_check_branch
      %105 = sbr.rel (0) target = $region53
    $region52: #{tpu_custom_call.1} parent=1 // pred_region
      %106 = dma.done [#allocation16], 512
    $region53: #{tpu_custom_call.1} parent=1 // pred_fallthru
      _
    %p107 = scmp.eq.s32.totalorder 0, 0
    // Predicated region
    $region54: #{tpu_custom_call.1} parent=1 // pred_check
      %p108 = pneg %p107
    $region55: #{tpu_custom_call.1} parent=1 // pred_check_branch
      %110 = sbr.rel (%p108) target = $region57
    $region56: #{tpu_custom_call.1} parent=1 // pred_region
      %v111 = vld [vmem:[#allocation6] sm:$0xff]
      %v112 = vld [vmem:[#allocation11] sm:$0xff]
      %v113 = vld [vmem:[#allocation11 + $0x8] sm:$0xff]
      %v114 = vld [vmem:[#allocation11 + $0x10] sm:$0xff]
      %v115 = vld [vmem:[#allocation11 + $0x18] sm:$0xff]
      %vm116 = vcmask 261120
      %v118 = vsel %vm116, %v111, 0
      %120 = vmatprep.subr.mxu0 0.0
      %121 = vmatpush1.msra.mxu0 0.0
      %122 = vmatprep.subr.mxu0 0.0
      %123 = vmatpush1.msra.mxu0 0.0
      %124 = vmatprep.subr.mxu0 0.0
      %125 = vmatpush1.msra.mxu0 0.0
      %126 = vmatprep.subr.mxu0 0.0
      %127 = vmatpush1.msra.mxu0 0.0
      %128 = vmatprep.subr.mxu0 0.0
      %129 = vmatpush1.msra.mxu0 0.0
      %130 = vmatprep.subr.mxu0 0.0
      %131 = vmatpush1.msra.mxu0 0.0
      %132 = vmatprep.subr.mxu0 0.0
      %133 = vmatpush1.msra.mxu0 0.0
      %134 = vmatprep.subr.mxu0 0.0
      %135 = vmatpush1.msra.mxu0 0.0
      %136 = vmatprep.subr.mxu0 0.0
      %137 = vmatpush1.msra.mxu0 0.0
      %138 = vmatprep.subr.mxu0 0.0
      %139 = vmatpush1.msra.mxu0 0.0
      %140 = vmatprep.subr.mxu0 0.0
      %141 = vmatpush1.msra.mxu0 0.0
      %142 = vmatprep.subr.mxu0 0.0
      %143 = vmatpush1.msra.mxu0 0.0
      %144 = vmatprep.subr.mxu0 0.0
      %145 = vmatpush1.msra.mxu0 %v115
      %146 = vmatprep.subr.mxu0 0.0
      %147 = vmatpush1.msra.mxu0 %v114
      %148 = vmatprep.subr.mxu0 0.0
      %149 = vmatpush1.msra.mxu0 %v113
      %150 = vmatprep.subr.mxu0 0.0
      %151 = vmatpush1.msra.mxu0 %v112
      %152 = vmatprep.subr.mxu0 0.0
      %153 = vmatpush2.msra.mxu0 0.0
      %154 = vmatprep.subr.mxu0 0.0
      %155 = vmatpush2.msra.mxu0 0.0
      %156 = vmatprep.subr.mxu0 0.0
      %157 = vmatpush2.msra.mxu0 0.0
      %158 = vmatprep.subr.mxu0 0.0
      %159 = vmatpush2.msra.mxu0 0.0
      %160 = vmatprep.subr.mxu0 0.0
      %161 = vmatpush2.msra.mxu0 0.0
      %162 = vmatprep.subr.mxu0 0.0
      %163 = vmatpush2.msra.mxu0 0.0
      %164 = vmatprep.subr.mxu0 0.0
      %165 = vmatpush2.msra.mxu0 0.0
      %166 = vmatprep.subr.mxu0 0.0
      %167 = vmatpush2.msra.mxu0 0.0
      %168 = vmatprep.subr.mxu0 0.0
      %169 = vmatpush2.msra.mxu0 0.0
      %170 = vmatprep.subr.mxu0 0.0
      %171 = vmatpush2.msra.mxu0 0.0
      %172 = vmatprep.subr.mxu0 0.0
      %173 = vmatpush2.msra.mxu0 0.0
      %174 = vmatprep.subr.mxu0 0.0
      %175 = vmatpush2.msra.mxu0 0.0
      %176 = vmatprep.subr.mxu0 0.0
      %177 = vmatpush2.msra.mxu0 0.0
      %178 = vmatprep.subr.mxu0 0.0
      %179 = vmatpush2.msra.mxu0 0.0
      %180 = vmatprep.subr.mxu0 0.0
      %181 = vmatpush2.msra.mxu0 0.0
      %182 = vmatprep.subr.mxu0 0.0
      %183 = vmatpush2.msra.mxu0 0.0
      %184 = vmatprep.mubr.f32.mxu0 0.0
      %185 = vmatmul.mubr.f32.gmra.mxu0 %v118
      %v186 = vpop.f32.mrf.mxu0
      %v187 = vadd.f32 0.0, %v186
      %v188 = vpop.f32.mrf.mxu0
      %189 = vdwg.mxu0
      %190 = vst.msk [vmem:[#allocation2] sm:$0xff] %vm116, %v187
      %vm191 = vcmask 31744
      %192 = vst.msk [vmem:[#allocation3] sm:$0xff] %vm191, -inf
      %193 = vst.msk [vmem:[#allocation4] sm:$0xff] %vm191, 0.0
      %194 = vst.msk [vmem:[#allocation5] sm:$0xff] %vm116, 0.0
    $region57: #{tpu_custom_call.1} parent=1 // pred_fallthru
      _
    %v195 = vld [vmem:[#allocation9] sm:$0xff]
    %v196 = vld [vmem:[#allocation9 + $0x8] sm:$0xff]
    %v197 = vld [vmem:[#allocation12] sm:$0xff]
    %v198 = vld [vmem:[#allocation12 + $0x8] sm:$0xff]
    %v199 = vld [vmem:[#allocation12 + $0x10] sm:$0xff]
    %v200 = vld [vmem:[#allocation12 + $0x18] sm:$0xff]
    %vm201 = vcmask 261120
    %v203 = vsel %vm201, %v195, 0
    %v206 = vsel %vm201, %v196, 0
    %208 = vmatprep.subr.mxu0 0.0
    %209 = vmatpush1.msra.mxu0 0.0
    %210 = vmatprep.subr.mxu0 0.0
    %211 = vmatpush1.msra.mxu0 0.0
    %212 = vmatprep.subr.mxu0 0.0
    %213 = vmatpush1.msra.mxu0 0.0
    %214 = vmatprep.subr.mxu0 0.0
    %215 = vmatpush1.msra.mxu0 0.0
    %216 = vmatprep.subr.mxu0 0.0
    %217 = vmatpush1.msra.mxu0 0.0
    %218 = vmatprep.subr.mxu0 0.0
    %219 = vmatpush1.msra.mxu0 0.0
    %220 = vmatprep.subr.mxu0 0.0
    %221 = vmatpush1.msra.mxu0 0.0
    %222 = vmatprep.subr.mxu0 0.0
    %223 = vmatpush1.msra.mxu0 0.0
    %224 = vmatprep.subr.mxu0 0.0
    %225 = vmatpush1.msra.mxu0 0.0
    %226 = vmatprep.subr.mxu0 0.0
    %227 = vmatpush1.msra.mxu0 0.0
    %228 = vmatprep.subr.mxu0 0.0
    %229 = vmatpush1.msra.mxu0 0.0
    %230 = vmatprep.subr.mxu0 0.0
    %231 = vmatpush1.msra.mxu0 0.0
    %232 = vmatprep.subr.mxu0 0.0
    %233 = vmatpush1.msra.mxu0 %v200
    %234 = vmatprep.subr.mxu0 0.0
    %235 = vmatpush1.msra.mxu0 %v199
    %236 = vmatprep.subr.mxu0 0.0
    %237 = vmatpush1.msra.mxu0 %v198
    %238 = vmatprep.subr.mxu0 0.0
    %239 = vmatpush1.msra.mxu0 %v197
    %240 = vmatprep.subr.mxu0 0.0
    %241 = vmatpush2.msra.mxu0 0.0
    %242 = vmatprep.subr.mxu0 0.0
    %243 = vmatpush2.msra.mxu0 0.0
    %244 = vmatprep.subr.mxu0 0.0
    %245 = vmatpush2.msra.mxu0 0.0
    %246 = vmatprep.subr.mxu0 0.0
    %247 = vmatpush2.msra.mxu0 0.0
    %248 = vmatprep.subr.mxu0 0.0
    %249 = vmatpush2.msra.mxu0 0.0
    %250 = vmatprep.subr.mxu0 0.0
    %251 = vmatpush2.msra.mxu0 0.0
    %252 = vmatprep.subr.mxu0 0.0
    %253 = vmatpush2.msra.mxu0 0.0
    %254 = vmatprep.subr.mxu0 0.0
    %255 = vmatpush2.msra.mxu0 0.0
    %256 = vmatprep.subr.mxu0 0.0
    %257 = vmatpush2.msra.mxu0 0.0
    %258 = vmatprep.subr.mxu0 0.0
    %259 = vmatpush2.msra.mxu0 0.0
    %260 = vmatprep.subr.mxu0 0.0
    %261 = vmatpush2.msra.mxu0 0.0
    %262 = vmatprep.subr.mxu0 0.0
    %263 = vmatpush2.msra.mxu0 0.0
    %264 = vmatprep.subr.mxu0 0.0
    %265 = vmatpush2.msra.mxu0 0.0
    %266 = vmatprep.subr.mxu0 0.0
    %267 = vmatpush2.msra.mxu0 0.0
    %268 = vmatprep.subr.mxu0 0.0
    %269 = vmatpush2.msra.mxu0 0.0
    %270 = vmatprep.subr.mxu0 0.0
    %271 = vmatpush2.msra.mxu0 0.0
    %272 = vmatprep.mubr.f32.mxu0 0.0
    %273 = vmatmul.mubr.f32.gmra.mxu0 %v203
    %v274 = vpop.f32.mrf.mxu0
    %v275 = vadd.f32 0.0, %v274
    %v276 = vpop.f32.mrf.mxu0
    %277 = vmatprep.mubr.f32.mxu0 0.0
    %278 = vmatmul.mubr.f32.gmra.mxu0 %v206
    %v279 = vpop.f32.mrf.mxu0
    %v280 = vadd.f32 0.0, %v279
    %v281 = vpop.f32.mrf.mxu0
    %282 = vdwg.mxu0
    %v283 = vld [vmem:[#allocation14] sm:$0xff]
    %v284 = vld [vmem:[#allocation14 + $0x8] sm:$0xff]
    %v285 = vld [vmem:[#allocation14 + $0x10] sm:$0xff]
    %v286 = vld [vmem:[#allocation14 + $0x18] sm:$0xff]
    %287 = vmatprep.subr.mxu0 0.0
    %288 = vmatpush1.msra.mxu0 0.0
    %289 = vmatprep.subr.mxu0 0.0
    %290 = vmatpush1.msra.mxu0 0.0
    %291 = vmatprep.subr.mxu0 0.0
    %292 = vmatpush1.msra.mxu0 0.0
    %293 = vmatprep.subr.mxu0 0.0
    %294 = vmatpush1.msra.mxu0 0.0
    %295 = vmatprep.subr.mxu0 0.0
    %296 = vmatpush1.msra.mxu0 0.0
    %297 = vmatprep.subr.mxu0 0.0
    %298 = vmatpush1.msra.mxu0 0.0
    %299 = vmatprep.subr.mxu0 0.0
    %300 = vmatpush1.msra.mxu0 0.0
    %301 = vmatprep.subr.mxu0 0.0
    %302 = vmatpush1.msra.mxu0 0.0
    %303 = vmatprep.subr.mxu0 0.0
    %304 = vmatpush1.msra.mxu0 0.0
    %305 = vmatprep.subr.mxu0 0.0
    %306 = vmatpush1.msra.mxu0 0.0
    %307 = vmatprep.subr.mxu0 0.0
    %308 = vmatpush1.msra.mxu0 0.0
    %309 = vmatprep.subr.mxu0 0.0
    %310 = vmatpush1.msra.mxu0 0.0
    %311 = vmatprep.subr.mxu0 0.0
    %312 = vmatpush1.msra.mxu0 %v286
    %313 = vmatprep.subr.mxu0 0.0
    %314 = vmatpush1.msra.mxu0 %v285
    %315 = vmatprep.subr.mxu0 0.0
    %316 = vmatpush1.msra.mxu0 %v284
    %317 = vmatprep.subr.mxu0 0.0
    %318 = vmatpush1.msra.mxu0 %v283
    %319 = vmatprep.subr.mxu0 0.0
    %320 = vmatpush2.msra.mxu0 0.0
    %321 = vmatprep.subr.mxu0 0.0
    %322 = vmatpush2.msra.mxu0 0.0
    %323 = vmatprep.subr.mxu0 0.0
    %324 = vmatpush2.msra.mxu0 0.0
    %325 = vmatprep.subr.mxu0 0.0
    %326 = vmatpush2.msra.mxu0 0.0
    %327 = vmatprep.subr.mxu0 0.0
    %328 = vmatpush2.msra.mxu0 0.0
    %329 = vmatprep.subr.mxu0 0.0
    %330 = vmatpush2.msra.mxu0 0.0
    %331 = vmatprep.subr.mxu0 0.0
    %332 = vmatpush2.msra.mxu0 0.0
    %333 = vmatprep.subr.mxu0 0.0
    %334 = vmatpush2.msra.mxu0 0.0
    %335 = vmatprep.subr.mxu0 0.0
    %336 = vmatpush2.msra.mxu0 0.0
    %337 = vmatprep.subr.mxu0 0.0
    %338 = vmatpush2.msra.mxu0 0.0
    %339 = vmatprep.subr.mxu0 0.0
    %340 = vmatpush2.msra.mxu0 0.0
    %341 = vmatprep.subr.mxu0 0.0
    %342 = vmatpush2.msra.mxu0 0.0
    %343 = vmatprep.subr.mxu0 0.0
    %344 = vmatpush2.msra.mxu0 0.0
    %345 = vmatprep.subr.mxu0 0.0
    %346 = vmatpush2.msra.mxu0 0.0
    %347 = vmatprep.subr.mxu0 0.0
    %348 = vmatpush2.msra.mxu0 0.0
    %349 = vmatprep.subr.mxu0 0.0
    %350 = vmatpush2.msra.mxu0 0.0
    %351 = vmatprep.mubr.f32.mxu0 0.0
    %352 = vmatmul.mubr.f32.gmra.mxu0 %v203
    %v353 = vpop.f32.mrf.mxu0
    %v354 = vadd.f32 0.0, %v353
    %v355 = vpop.f32.mrf.mxu0
    %356 = vmatprep.mubr.f32.mxu0 0.0
    %357 = vmatmul.mubr.f32.gmra.mxu0 %v206
    %v358 = vpop.f32.mrf.mxu0
    %v359 = vadd.f32 0.0, %v358
    %v360 = vpop.f32.mrf.mxu0
    %361 = vdwg.mxu0
    %v362 = vld [vmem:[#allocation2] sm:$0xff]
    %vm363 = vcmask 64512
    %v365 = vsel %vm363, %v362, 0
    %v368 = vsel %vm363, %v275, 0
    %v371 = vsel %vm363, %v280, 0
    %373 = vmatprep.subr.mxu0 0.0
    %374 = vmatpush1.xpose.msra.mxu0 0.0
    %375 = vmatprep.subr.mxu0 0.0
    %376 = vmatpush1.xpose.msra.mxu0 0.0
    %377 = vmatprep.subr.mxu0 0.0
    %378 = vmatpush1.xpose.msra.mxu0 0.0
    %379 = vmatprep.subr.mxu0 0.0
    %380 = vmatpush1.xpose.msra.mxu0 0.0
    %381 = vmatprep.subr.mxu0 0.0
    %382 = vmatpush1.xpose.msra.mxu0 0.0
    %383 = vmatprep.subr.mxu0 0.0
    %384 = vmatpush1.xpose.msra.mxu0 0.0
    %385 = vmatprep.subr.mxu0 0.0
    %386 = vmatpush1.xpose.msra.mxu0 0.0
    %387 = vmatprep.subr.mxu0 0.0
    %388 = vmatpush1.xpose.msra.mxu0 0.0
    %389 = vmatprep.subr.mxu0 0.0
    %390 = vmatpush1.xpose.msra.mxu0 0.0
    %391 = vmatprep.subr.mxu0 0.0
    %392 = vmatpush1.xpose.msra.mxu0 0.0
    %393 = vmatprep.subr.mxu0 0.0
    %394 = vmatpush1.xpose.msra.mxu0 0.0
    %395 = vmatprep.subr.mxu0 0.0
    %396 = vmatpush1.xpose.msra.mxu0 0.0
    %397 = vmatprep.subr.mxu0 0.0
    %398 = vmatpush1.xpose.msra.mxu0 0.0
    %399 = vmatprep.subr.mxu0 0.0
    %400 = vmatpush1.xpose.msra.mxu0 0.0
    %401 = vmatprep.subr.mxu0 0.0
    %402 = vmatpush1.xpose.msra.mxu0 %v371
    %403 = vmatprep.subr.mxu0 0.0
    %404 = vmatpush1.xpose.msra.mxu0 %v368
    %405 = vmatprep.subr.mxu0 0.0
    %406 = vmatpush2.xpose.msra.mxu0 0.0
    %407 = vmatprep.subr.mxu0 0.0
    %408 = vmatpush2.xpose.msra.mxu0 0.0
    %409 = vmatprep.subr.mxu0 0.0
    %410 = vmatpush2.xpose.msra.mxu0 0.0
    %411 = vmatprep.subr.mxu0 0.0
    %412 = vmatpush2.xpose.msra.mxu0 0.0
    %413 = vmatprep.subr.mxu0 0.0
    %414 = vmatpush2.xpose.msra.mxu0 0.0
    %415 = vmatprep.subr.mxu0 0.0
    %416 = vmatpush2.xpose.msra.mxu0 0.0
    %417 = vmatprep.subr.mxu0 0.0
    %418 = vmatpush2.xpose.msra.mxu0 0.0
    %419 = vmatprep.subr.mxu0 0.0
    %420 = vmatpush2.xpose.msra.mxu0 0.0
    %421 = vmatprep.subr.mxu0 0.0
    %422 = vmatpush2.xpose.msra.mxu0 0.0
    %423 = vmatprep.subr.mxu0 0.0
    %424 = vmatpush2.xpose.msra.mxu0 0.0
    %425 = vmatprep.subr.mxu0 0.0
    %426 = vmatpush2.xpose.msra.mxu0 0.0
    %427 = vmatprep.subr.mxu0 0.0
    %428 = vmatpush2.xpose.msra.mxu0 0.0
    %429 = vmatprep.subr.mxu0 0.0
    %430 = vmatpush2.xpose.msra.mxu0 0.0
    %431 = vmatprep.subr.mxu0 0.0
    %432 = vmatpush2.xpose.msra.mxu0 0.0
    %433 = vmatprep.subr.mxu0 0.0
    %434 = vmatpush2.xpose.msra.mxu0 0.0
    %435 = vmatprep.subr.mxu0 0.0
    %436 = vmatpush2.xpose.msra.mxu0 0.0
    %437 = vmatprep.mubr.f32.mxu0 0.0
    %438 = vmatmul.mubr.f32.gmra.mxu0 %v365
    %v439 = vpop.f32.mrf.mxu0
    %v440 = vadd.f32 0.0, %v439
    %v441 = vpop.f32.mrf.mxu0
    %442 = vdwg.mxu0
    %v443 = vld [vmem:[#allocation3] sm:$0xff]
    %v444 = vld [vmem:[#allocation4] sm:$0xff]
    %vm445 = vcmask 130048
    %v446 = vsel %vm445, %v440, -inf
    %447 = vmax.xlane.f32.xlu0 %v446
    %v448 = vpop.xlane.xlu0 %447
    %v449 = vmax.f32 %v443, %v448
    %v450 = vsub.f32 %v443, %v449
    %v451 = vmul.f32 %v450, 1.442695
    %v452 = vpow.pop %v451
    %454 = vset.pattern.permute.xlu0 0
    %455 = vperm.xlu0 %454, %v449
    %v456 = vpop.permute.xlu0 %455
    %v458 = vsub.f32 %v440, %v456
    %v459 = vmul.f32 %v458, 1.442695
    %v460 = vpow.pop %v459
    %v461 = vmul.f32 %v452, %v444
    %v462 = vsel %vm445, %v460, 0.0
    %463 = vadd.xlane.f32.xlu0 %v462
    %v464 = vpop.xlane.xlu0 %463
    %v465 = vadd.f32 %v461, %v464
    %vm466 = vcmask 7168
    %467 = vst.msk [vmem:[#allocation4] sm:$0xff] %vm466, %v465
    %v468 = vld [vmem:[#allocation5] sm:$0xff]
    %470 = vset.pattern.permute.xlu0 0
    %471 = vperm.xlu0 %470, %v452
    %v472 = vpop.permute.xlu0 %471
    %v474 = vmul.f32 %v472, %v468
    %v476 = vsel %vm445, %v460, 0
    %478 = vmatprep.subr.mxu0 0.0
    %479 = vmatpush1.msra.mxu0 0.0
    %480 = vmatprep.subr.mxu0 0.0
    %481 = vmatpush1.msra.mxu0 0.0
    %482 = vmatprep.subr.mxu0 0.0
    %483 = vmatpush1.msra.mxu0 0.0
    %484 = vmatprep.subr.mxu0 0.0
    %485 = vmatpush1.msra.mxu0 0.0
    %486 = vmatprep.subr.mxu0 0.0
    %487 = vmatpush1.msra.mxu0 0.0
    %488 = vmatprep.subr.mxu0 0.0
    %489 = vmatpush1.msra.mxu0 0.0
    %490 = vmatprep.subr.mxu0 0.0
    %491 = vmatpush1.msra.mxu0 0.0
    %492 = vmatprep.subr.mxu0 0.0
    %493 = vmatpush1.msra.mxu0 0.0
    %494 = vmatprep.subr.mxu0 0.0
    %495 = vmatpush1.msra.mxu0 0.0
    %496 = vmatprep.subr.mxu0 0.0
    %497 = vmatpush1.msra.mxu0 0.0
    %498 = vmatprep.subr.mxu0 0.0
    %499 = vmatpush1.msra.mxu0 0.0
    %500 = vmatprep.subr.mxu0 0.0
    %501 = vmatpush1.msra.mxu0 0.0
    %502 = vmatprep.subr.mxu0 0.0
    %503 = vmatpush1.msra.mxu0 0.0
    %504 = vmatprep.subr.mxu0 0.0
    %505 = vmatpush1.msra.mxu0 0.0
    %506 = vmatprep.subr.mxu0 0.0
    %507 = vmatpush1.msra.mxu0 %v359
    %508 = vmatprep.subr.mxu0 0.0
    %509 = vmatpush1.msra.mxu0 %v354
    %510 = vmatprep.subr.mxu0 0.0
    %511 = vmatpush2.msra.mxu0 0.0
    %512 = vmatprep.subr.mxu0 0.0
    %513 = vmatpush2.msra.mxu0 0.0
    %514 = vmatprep.subr.mxu0 0.0
    %515 = vmatpush2.msra.mxu0 0.0
    %516 = vmatprep.subr.mxu0 0.0
    %517 = vmatpush2.msra.mxu0 0.0
    %518 = vmatprep.subr.mxu0 0.0
    %519 = vmatpush2.msra.mxu0 0.0
    %520 = vmatprep.subr.mxu0 0.0
    %521 = vmatpush2.msra.mxu0 0.0
    %522 = vmatprep.subr.mxu0 0.0
    %523 = vmatpush2.msra.mxu0 0.0
    %524 = vmatprep.subr.mxu0 0.0
    %525 = vmatpush2.msra.mxu0 0.0
    %526 = vmatprep.subr.mxu0 0.0
    %527 = vmatpush2.msra.mxu0 0.0
    %528 = vmatprep.subr.mxu0 0.0
    %529 = vmatpush2.msra.mxu0 0.0
    %530 = vmatprep.subr.mxu0 0.0
    %531 = vmatpush2.msra.mxu0 0.0
    %532 = vmatprep.subr.mxu0 0.0
    %533 = vmatpush2.msra.mxu0 0.0
    %534 = vmatprep.subr.mxu0 0.0
    %535 = vmatpush2.msra.mxu0 0.0
    %536 = vmatprep.subr.mxu0 0.0
    %537 = vmatpush2.msra.mxu0 0.0
    %538 = vmatprep.subr.mxu0 0.0
    %539 = vmatpush2.msra.mxu0 0.0
    %540 = vmatprep.subr.mxu0 0.0
    %541 = vmatpush2.msra.mxu0 0.0
    %542 = vmatprep.mubr.f32.mxu0 0.0
    %543 = vmatmul.mubr.f32.gmra.mxu0 %v476
    %v544 = vpop.f32.mrf.mxu0
    %v545 = vadd.f32 0.0, %v544
    %v546 = vpop.f32.mrf.mxu0
    %547 = vdwg.mxu0
    %v548 = vadd.f32 %v474, %v545
    %549 = vst.msk [vmem:[#allocation5] sm:$0xff] %vm363, %v548
    %550 = vst.msk [vmem:[#allocation3] sm:$0xff] %vm466, %v449
    %551 = vrot.lane.b32.xlu0 %v362, 120
    %v552 = vpop.permute.xlu0 %551
    %553 = vrot.lane.b32.xlu0 %v275, 120
    %v554 = vpop.permute.xlu0 %553
    %555 = vrot.lane.b32.xlu0 %v280, 120
    %v556 = vpop.permute.xlu0 %555
    %v557 = vsel %vm363, %v552, 0
    %v559 = vsel %vm363, %v554, 0
    %v561 = vsel %vm363, %v556, 0
    %563 = vmatprep.subr.mxu0 0.0
    %564 = vmatpush1.xpose.msra.mxu0 0.0
    %565 = vmatprep.subr.mxu0 0.0
    %566 = vmatpush1.xpose.msra.mxu0 0.0
    %567 = vmatprep.subr.mxu0 0.0
    %568 = vmatpush1.xpose.msra.mxu0 0.0
    %569 = vmatprep.subr.mxu0 0.0
    %570 = vmatpush1.xpose.msra.mxu0 0.0
    %571 = vmatprep.subr.mxu0 0.0
    %572 = vmatpush1.xpose.msra.mxu0 0.0
    %573 = vmatprep.subr.mxu0 0.0
    %574 = vmatpush1.xpose.msra.mxu0 0.0
    %575 = vmatprep.subr.mxu0 0.0
    %576 = vmatpush1.xpose.msra.mxu0 0.0
    %577 = vmatprep.subr.mxu0 0.0
    %578 = vmatpush1.xpose.msra.mxu0 0.0
    %579 = vmatprep.subr.mxu0 0.0
    %580 = vmatpush1.xpose.msra.mxu0 0.0
    %581 = vmatprep.subr.mxu0 0.0
    %582 = vmatpush1.xpose.msra.mxu0 0.0
    %583 = vmatprep.subr.mxu0 0.0
    %584 = vmatpush1.xpose.msra.mxu0 0.0
    %585 = vmatprep.subr.mxu0 0.0
    %586 = vmatpush1.xpose.msra.mxu0 0.0
    %587 = vmatprep.subr.mxu0 0.0
    %588 = vmatpush1.xpose.msra.mxu0 0.0
    %589 = vmatprep.subr.mxu0 0.0
    %590 = vmatpush1.xpose.msra.mxu0 0.0
    %591 = vmatprep.subr.mxu0 0.0
    %592 = vmatpush1.xpose.msra.mxu0 %v561
    %593 = vmatprep.subr.mxu0 0.0
    %594 = vmatpush1.xpose.msra.mxu0 %v559
    %595 = vmatprep.subr.mxu0 0.0
    %596 = vmatpush2.xpose.msra.mxu0 0.0
    %597 = vmatprep.subr.mxu0 0.0
    %598 = vmatpush2.xpose.msra.mxu0 0.0
    %599 = vmatprep.subr.mxu0 0.0
    %600 = vmatpush2.xpose.msra.mxu0 0.0
    %601 = vmatprep.subr.mxu0 0.0
    %602 = vmatpush2.xpose.msra.mxu0 0.0
    %603 = vmatprep.subr.mxu0 0.0
    %604 = vmatpush2.xpose.msra.mxu0 0.0
    %605 = vmatprep.subr.mxu0 0.0
    %606 = vmatpush2.xpose.msra.mxu0 0.0
    %607 = vmatprep.subr.mxu0 0.0
    %608 = vmatpush2.xpose.msra.mxu0 0.0
    %609 = vmatprep.subr.mxu0 0.0
    %610 = vmatpush2.xpose.msra.mxu0 0.0
    %611 = vmatprep.subr.mxu0 0.0
    %612 = vmatpush2.xpose.msra.mxu0 0.0
    %613 = vmatprep.subr.mxu0 0.0
    %614 = vmatpush2.xpose.msra.mxu0 0.0
    %615 = vmatprep.subr.mxu0 0.0
    %616 = vmatpush2.xpose.msra.mxu0 0.0
    %617 = vmatprep.subr.mxu0 0.0
    %618 = vmatpush2.xpose.msra.mxu0 0.0
    %619 = vmatprep.subr.mxu0 0.0
    %620 = vmatpush2.xpose.msra.mxu0 0.0
    %621 = vmatprep.subr.mxu0 0.0
    %622 = vmatpush2.xpose.msra.mxu0 0.0
    %623 = vmatprep.subr.mxu0 0.0
    %624 = vmatpush2.xpose.msra.mxu0 0.0
    %625 = vmatprep.subr.mxu0 0.0
    %626 = vmatpush2.xpose.msra.mxu0 0.0
    %627 = vmatprep.mubr.f32.mxu0 0.0
    %628 = vmatmul.mubr.f32.gmra.mxu0 %v557
    %v629 = vpop.f32.mrf.mxu0
    %v630 = vadd.f32 0.0, %v629
    %v631 = vpop.f32.mrf.mxu0
    %632 = vdwg.mxu0
    %v633 = vld [vmem:[#allocation3] sm:$0xff]
    %v634 = vld [vmem:[#allocation4] sm:$0xff]
    %v635 = vsel %vm445, %v630, -inf
    %636 = vmax.xlane.f32.xlu0 %v635
    %v637 = vpop.xlane.xlu0 %636
    %v638 = vmax.f32 %v633, %v637
    %v639 = vsub.f32 %v633, %v638
    %v640 = vmul.f32 %v639, 1.442695
    %v641 = vpow.pop %v640
    %643 = vset.pattern.permute.xlu0 1
    %644 = vperm.xlu0 %643, %v638
    %v645 = vpop.permute.xlu0 %644
    %v647 = vsub.f32 %v630, %v645
    %v648 = vmul.f32 %v647, 1.442695
    %v649 = vpow.pop %v648
    %v650 = vmul.f32 %v641, %v634
    %v651 = vsel %vm445, %v649, 0.0
    %652 = vadd.xlane.f32.xlu0 %v651
    %v653 = vpop.xlane.xlu0 %652
    %v654 = vadd.f32 %v650, %v653
    %vm655 = vcmask 15368
    %656 = vst.msk [vmem:[#allocation4] sm:$0xff] %vm655, %v654
    %v657 = vld [vmem:[#allocation5] sm:$0xff]
    %659 = vset.pattern.permute.xlu0 1
    %660 = vperm.xlu0 %659, %v641
    %v661 = vpop.permute.xlu0 %660
    %v663 = vmul.f32 %v661, %v657
    %666 = vrot.lane.b32.xlu0 %v354, 120
    %v667 = vpop.permute.xlu0 %666
    %668 = vrot.lane.b32.xlu0 %v359, 120
    %v669 = vpop.permute.xlu0 %668
    %v673 = vsel %vm445, %v649, 0
    %675 = vmatprep.subr.mxu0 0.0
    %676 = vmatpush1.msra.mxu0 0.0
    %677 = vmatprep.subr.mxu0 0.0
    %678 = vmatpush1.msra.mxu0 0.0
    %679 = vmatprep.subr.mxu0 0.0
    %680 = vmatpush1.msra.mxu0 0.0
    %681 = vmatprep.subr.mxu0 0.0
    %682 = vmatpush1.msra.mxu0 0.0
    %683 = vmatprep.subr.mxu0 0.0
    %684 = vmatpush1.msra.mxu0 0.0
    %685 = vmatprep.subr.mxu0 0.0
    %686 = vmatpush1.msra.mxu0 0.0
    %687 = vmatprep.subr.mxu0 0.0
    %688 = vmatpush1.msra.mxu0 0.0
    %689 = vmatprep.subr.mxu0 0.0
    %690 = vmatpush1.msra.mxu0 0.0
    %691 = vmatprep.subr.mxu0 0.0
    %692 = vmatpush1.msra.mxu0 0.0
    %693 = vmatprep.subr.mxu0 0.0
    %694 = vmatpush1.msra.mxu0 0.0
    %695 = vmatprep.subr.mxu0 0.0
    %696 = vmatpush1.msra.mxu0 0.0
    %697 = vmatprep.subr.mxu0 0.0
    %698 = vmatpush1.msra.mxu0 0.0
    %699 = vmatprep.subr.mxu0 0.0
    %700 = vmatpush1.msra.mxu0 0.0
    %701 = vmatprep.subr.mxu0 0.0
    %702 = vmatpush1.msra.mxu0 0.0
    %703 = vmatprep.subr.mxu0 0.0
    %704 = vmatpush1.msra.mxu0 %v669
    %705 = vmatprep.subr.mxu0 0.0
    %706 = vmatpush1.msra.mxu0 %v667
    %707 = vmatprep.subr.mxu0 0.0
    %708 = vmatpush2.msra.mxu0 0.0
    %709 = vmatprep.subr.mxu0 0.0
    %710 = vmatpush2.msra.mxu0 0.0
    %711 = vmatprep.subr.mxu0 0.0
    %712 = vmatpush2.msra.mxu0 0.0
    %713 = vmatprep.subr.mxu0 0.0
    %714 = vmatpush2.msra.mxu0 0.0
    %715 = vmatprep.subr.mxu0 0.0
    %716 = vmatpush2.msra.mxu0 0.0
    %717 = vmatprep.subr.mxu0 0.0
    %718 = vmatpush2.msra.mxu0 0.0
    %719 = vmatprep.subr.mxu0 0.0
    %720 = vmatpush2.msra.mxu0 0.0
    %721 = vmatprep.subr.mxu0 0.0
    %722 = vmatpush2.msra.mxu0 0.0
    %723 = vmatprep.subr.mxu0 0.0
    %724 = vmatpush2.msra.mxu0 0.0
    %725 = vmatprep.subr.mxu0 0.0
    %726 = vmatpush2.msra.mxu0 0.0
    %727 = vmatprep.subr.mxu0 0.0
    %728 = vmatpush2.msra.mxu0 0.0
    %729 = vmatprep.subr.mxu0 0.0
    %730 = vmatpush2.msra.mxu0 0.0
    %731 = vmatprep.subr.mxu0 0.0
    %732 = vmatpush2.msra.mxu0 0.0
    %733 = vmatprep.subr.mxu0 0.0
    %734 = vmatpush2.msra.mxu0 0.0
    %735 = vmatprep.subr.mxu0 0.0
    %736 = vmatpush2.msra.mxu0 0.0
    %737 = vmatprep.subr.mxu0 0.0
    %738 = vmatpush2.msra.mxu0 0.0
    %739 = vmatprep.mubr.f32.mxu0 0.0
    %740 = vmatmul.mubr.f32.gmra.mxu0 %v673
    %v741 = vpop.f32.mrf.mxu0
    %v742 = vadd.f32 0.0, %v741
    %v743 = vpop.f32.mrf.mxu0
    %744 = vdwg.mxu0
    %746 = vrot.lane.b32.xlu0 %v742, 8
    %v747 = vpop.permute.xlu0 %746
    %v749 = vadd.f32 %v663, %v747
    %vm750 = vcmask 130112
    %751 = vst.msk [vmem:[#allocation5] sm:$0xff] %vm750, %v749
    %752 = vst.msk [vmem:[#allocation3] sm:$0xff] %vm655, %v638
    %753 = vrot.lane.b32.xlu0 %v362, 112
    %v754 = vpop.permute.xlu0 %753
    %755 = vrot.lane.b32.xlu0 %v275, 112
    %v756 = vpop.permute.xlu0 %755
    %757 = vrot.lane.b32.xlu0 %v280, 112
    %v758 = vpop.permute.xlu0 %757
    %v759 = vsel %vm363, %v754, 0
    %v761 = vsel %vm363, %v756, 0
    %v763 = vsel %vm363, %v758, 0
    %765 = vmatprep.subr.mxu0 0.0
    %766 = vmatpush1.xpose.msra.mxu0 0.0
    %767 = vmatprep.subr.mxu0 0.0
    %768 = vmatpush1.xpose.msra.mxu0 0.0
    %769 = vmatprep.subr.mxu0 0.0
    %770 = vmatpush1.xpose.msra.mxu0 0.0
    %771 = vmatprep.subr.mxu0 0.0
    %772 = vmatpush1.xpose.msra.mxu0 0.0
    %773 = vmatprep.subr.mxu0 0.0
    %774 = vmatpush1.xpose.msra.mxu0 0.0
    %775 = vmatprep.subr.mxu0 0.0
    %776 = vmatpush1.xpose.msra.mxu0 0.0
    %777 = vmatprep.subr.mxu0 0.0
    %778 = vmatpush1.xpose.msra.mxu0 0.0
    %779 = vmatprep.subr.mxu0 0.0
    %780 = vmatpush1.xpose.msra.mxu0 0.0
    %781 = vmatprep.subr.mxu0 0.0
    %782 = vmatpush1.xpose.msra.mxu0 0.0
    %783 = vmatprep.subr.mxu0 0.0
    %784 = vmatpush1.xpose.msra.mxu0 0.0
    %785 = vmatprep.subr.mxu0 0.0
    %786 = vmatpush1.xpose.msra.mxu0 0.0
    %787 = vmatprep.subr.mxu0 0.0
    %788 = vmatpush1.xpose.msra.mxu0 0.0
    %789 = vmatprep.subr.mxu0 0.0
    %790 = vmatpush1.xpose.msra.mxu0 0.0
    %791 = vmatprep.subr.mxu0 0.0
    %792 = vmatpush1.xpose.msra.mxu0 0.0
    %793 = vmatprep.subr.mxu0 0.0
    %794 = vmatpush1.xpose.msra.mxu0 %v763
    %795 = vmatprep.subr.mxu0 0.0
    %796 = vmatpush1.xpose.msra.mxu0 %v761
    %797 = vmatprep.subr.mxu0 0.0
    %798 = vmatpush2.xpose.msra.mxu0 0.0
    %799 = vmatprep.subr.mxu0 0.0
    %800 = vmatpush2.xpose.msra.mxu0 0.0
    %801 = vmatprep.subr.mxu0 0.0
    %802 = vmatpush2.xpose.msra.mxu0 0.0
    %803 = vmatprep.subr.mxu0 0.0
    %804 = vmatpush2.xpose.msra.mxu0 0.0
    %805 = vmatprep.subr.mxu0 0.0
    %806 = vmatpush2.xpose.msra.mxu0 0.0
    %807 = vmatprep.subr.mxu0 0.0
    %808 = vmatpush2.xpose.msra.mxu0 0.0
    %809 = vmatprep.subr.mxu0 0.0
    %810 = vmatpush2.xpose.msra.mxu0 0.0
    %811 = vmatprep.subr.mxu0 0.0
    %812 = vmatpush2.xpose.msra.mxu0 0.0
    %813 = vmatprep.subr.mxu0 0.0
    %814 = vmatpush2.xpose.msra.mxu0 0.0
    %815 = vmatprep.subr.mxu0 0.0
    %816 = vmatpush2.xpose.msra.mxu0 0.0
    %817 = vmatprep.subr.mxu0 0.0
    %818 = vmatpush2.xpose.msra.mxu0 0.0
    %819 = vmatprep.subr.mxu0 0.0
    %820 = vmatpush2.xpose.msra.mxu0 0.0
    %821 = vmatprep.subr.mxu0 0.0
    %822 = vmatpush2.xpose.msra.mxu0 0.0
    %823 = vmatprep.subr.mxu0 0.0
    %824 = vmatpush2.xpose.msra.mxu0 0.0
    %825 = vmatprep.subr.mxu0 0.0
    %826 = vmatpush2.xpose.msra.mxu0 0.0
    %827 = vmatprep.subr.mxu0 0.0
    %828 = vmatpush2.xpose.msra.mxu0 0.0
    %829 = vmatprep.mubr.f32.mxu0 0.0
    %830 = vmatmul.mubr.f32.gmra.mxu0 %v759
    %v831 = vpop.f32.mrf.mxu0
    %v832 = vadd.f32 0.0, %v831
    %v833 = vpop.f32.mrf.mxu0
    %834 = vdwg.mxu0
    %v835 = vld [vmem:[#allocation3] sm:$0xff]
    %v836 = vld [vmem:[#allocation4] sm:$0xff]
    %v837 = vsel %vm445, %v832, -inf
    %838 = vmax.xlane.f32.xlu0 %v837
    %v839 = vpop.xlane.xlu0 %838
    %v840 = vmax.f32 %v835, %v839
    %v841 = vsub.f32 %v835, %v840
    %v842 = vmul.f32 %v841, 1.442695
    %v843 = vpow.pop %v842
    %845 = vset.pattern.permute.xlu0 2
    %846 = vperm.xlu0 %845, %v840
    %v847 = vpop.permute.xlu0 %846
    %v849 = vsub.f32 %v832, %v847
    %v850 = vmul.f32 %v849, 1.442695
    %v851 = vpow.pop %v850
    %v852 = vmul.f32 %v843, %v836
    %v853 = vsel %vm445, %v851, 0.0
    %854 = vadd.xlane.f32.xlu0 %v853
    %v855 = vpop.xlane.xlu0 %854
    %v856 = vadd.f32 %v852, %v855
    %vm857 = vcmask 23568
    %858 = vst.msk [vmem:[#allocation4] sm:$0xff] %vm857, %v856
    %v859 = vld [vmem:[#allocation5] sm:$0xff]
    %861 = vset.pattern.permute.xlu0 2
    %862 = vperm.xlu0 %861, %v843
    %v863 = vpop.permute.xlu0 %862
    %v865 = vmul.f32 %v863, %v859
    %866 = vrot.lane.b32.xlu0 %v354, 112
    %v867 = vpop.permute.xlu0 %866
    %868 = vrot.lane.b32.xlu0 %v359, 112
    %v869 = vpop.permute.xlu0 %868
    %v873 = vsel %vm445, %v851, 0
    %875 = vmatprep.subr.mxu0 0.0
    %876 = vmatpush1.msra.mxu0 0.0
    %877 = vmatprep.subr.mxu0 0.0
    %878 = vmatpush1.msra.mxu0 0.0
    %879 = vmatprep.subr.mxu0 0.0
    %880 = vmatpush1.msra.mxu0 0.0
    %881 = vmatprep.subr.mxu0 0.0
    %882 = vmatpush1.msra.mxu0 0.0
    %883 = vmatprep.subr.mxu0 0.0
    %884 = vmatpush1.msra.mxu0 0.0
    %885 = vmatprep.subr.mxu0 0.0
    %886 = vmatpush1.msra.mxu0 0.0
    %887 = vmatprep.subr.mxu0 0.0
    %888 = vmatpush1.msra.mxu0 0.0
    %889 = vmatprep.subr.mxu0 0.0
    %890 = vmatpush1.msra.mxu0 0.0
    %891 = vmatprep.subr.mxu0 0.0
    %892 = vmatpush1.msra.mxu0 0.0
    %893 = vmatprep.subr.mxu0 0.0
    %894 = vmatpush1.msra.mxu0 0.0
    %895 = vmatprep.subr.mxu0 0.0
    %896 = vmatpush1.msra.mxu0 0.0
    %897 = vmatprep.subr.mxu0 0.0
    %898 = vmatpush1.msra.mxu0 0.0
    %899 = vmatprep.subr.mxu0 0.0
    %900 = vmatpush1.msra.mxu0 0.0
    %901 = vmatprep.subr.mxu0 0.0
    %902 = vmatpush1.msra.mxu0 0.0
    %903 = vmatprep.subr.mxu0 0.0
    %904 = vmatpush1.msra.mxu0 %v869
    %905 = vmatprep.subr.mxu0 0.0
    %906 = vmatpush1.msra.mxu0 %v867
    %907 = vmatprep.subr.mxu0 0.0
    %908 = vmatpush2.msra.mxu0 0.0
    %909 = vmatprep.subr.mxu0 0.0
    %910 = vmatpush2.msra.mxu0 0.0
    %911 = vmatprep.subr.mxu0 0.0
    %912 = vmatpush2.msra.mxu0 0.0
    %913 = vmatprep.subr.mxu0 0.0
    %914 = vmatpush2.msra.mxu0 0.0
    %915 = vmatprep.subr.mxu0 0.0
    %916 = vmatpush2.msra.mxu0 0.0
    %917 = vmatprep.subr.mxu0 0.0
    %918 = vmatpush2.msra.mxu0 0.0
    %919 = vmatprep.subr.mxu0 0.0
    %920 = vmatpush2.msra.mxu0 0.0
    %921 = vmatprep.subr.mxu0 0.0
    %922 = vmatpush2.msra.mxu0 0.0
    %923 = vmatprep.subr.mxu0 0.0
    %924 = vmatpush2.msra.mxu0 0.0
    %925 = vmatprep.subr.mxu0 0.0
    %926 = vmatpush2.msra.mxu0 0.0
    %927 = vmatprep.subr.mxu0 0.0
    %928 = vmatpush2.msra.mxu0 0.0
    %929 = vmatprep.subr.mxu0 0.0
    %930 = vmatpush2.msra.mxu0 0.0
    %931 = vmatprep.subr.mxu0 0.0
    %932 = vmatpush2.msra.mxu0 0.0
    %933 = vmatprep.subr.mxu0 0.0
    %934 = vmatpush2.msra.mxu0 0.0
    %935 = vmatprep.subr.mxu0 0.0
    %936 = vmatpush2.msra.mxu0 0.0
    %937 = vmatprep.subr.mxu0 0.0
    %938 = vmatpush2.msra.mxu0 0.0
    %939 = vmatprep.mubr.f32.mxu0 0.0
    %940 = vmatmul.mubr.f32.gmra.mxu0 %v873
    %v941 = vpop.f32.mrf.mxu0
    %v942 = vadd.f32 0.0, %v941
    %v943 = vpop.f32.mrf.mxu0
    %944 = vdwg.mxu0
    %946 = vrot.lane.b32.xlu0 %v942, 16
    %v947 = vpop.permute.xlu0 %946
    %v949 = vadd.f32 %v865, %v947
    %vm950 = vcmask 195712
    %951 = vst.msk [vmem:[#allocation5] sm:$0xff] %vm950, %v949
    %952 = vst.msk [vmem:[#allocation3] sm:$0xff] %vm857, %v840
    %953 = vrot.lane.b32.xlu0 %v362, 104
    %v954 = vpop.permute.xlu0 %953
    %955 = vrot.lane.b32.xlu0 %v275, 104
    %v956 = vpop.permute.xlu0 %955
    %957 = vrot.lane.b32.xlu0 %v280, 104
    %v958 = vpop.permute.xlu0 %957
    %v959 = vsel %vm363, %v954, 0
    %v961 = vsel %vm363, %v956, 0
    %v963 = vsel %vm363, %v958, 0
    %965 = vmatprep.subr.mxu0 0.0
    %966 = vmatpush1.xpose.msra.mxu0 0.0
    %967 = vmatprep.subr.mxu0 0.0
    %968 = vmatpush1.xpose.msra.mxu0 0.0
    %969 = vmatprep.subr.mxu0 0.0
    %970 = vmatpush1.xpose.msra.mxu0 0.0
    %971 = vmatprep.subr.mxu0 0.0
    %972 = vmatpush1.xpose.msra.mxu0 0.0
    %973 = vmatprep.subr.mxu0 0.0
    %974 = vmatpush1.xpose.msra.mxu0 0.0
    %975 = vmatprep.subr.mxu0 0.0
    %976 = vmatpush1.xpose.msra.mxu0 0.0
    %977 = vmatprep.subr.mxu0 0.0
    %978 = vmatpush1.xpose.msra.mxu0 0.0
    %979 = vmatprep.subr.mxu0 0.0
    %980 = vmatpush1.xpose.msra.mxu0 0.0
    %981 = vmatprep.subr.mxu0 0.0
    %982 = vmatpush1.xpose.msra.mxu0 0.0
    %983 = vmatprep.subr.mxu0 0.0
    %984 = vmatpush1.xpose.msra.mxu0 0.0
    %985 = vmatprep.subr.mxu0 0.0
    %986 = vmatpush1.xpose.msra.mxu0 0.0
    %987 = vmatprep.subr.mxu0 0.0
    %988 = vmatpush1.xpose.msra.mxu0 0.0
    %989 = vmatprep.subr.mxu0 0.0
    %990 = vmatpush1.xpose.msra.mxu0 0.0
    %991 = vmatprep.subr.mxu0 0.0
    %992 = vmatpush1.xpose.msra.mxu0 0.0
    %993 = vmatprep.subr.mxu0 0.0
    %994 = vmatpush1.xpose.msra.mxu0 %v963
    %995 = vmatprep.subr.mxu0 0.0
    %996 = vmatpush1.xpose.msra.mxu0 %v961
    %997 = vmatprep.subr.mxu0 0.0
    %998 = vmatpush2.xpose.msra.mxu0 0.0
    %999 = vmatprep.subr.mxu0 0.0
    %1000 = vmatpush2.xpose.msra.mxu0 0.0
    %1001 = vmatprep.subr.mxu0 0.0
    %1002 = vmatpush2.xpose.msra.mxu0 0.0
    %1003 = vmatprep.subr.mxu0 0.0
    %1004 = vmatpush2.xpose.msra.mxu0 0.0
    %1005 = vmatprep.subr.mxu0 0.0
    %1006 = vmatpush2.xpose.msra.mxu0 0.0
    %1007 = vmatprep.subr.mxu0 0.0
    %1008 = vmatpush2.xpose.msra.mxu0 0.0
    %1009 = vmatprep.subr.mxu0 0.0
    %1010 = vmatpush2.xpose.msra.mxu0 0.0
    %1011 = vmatprep.subr.mxu0 0.0
    %1012 = vmatpush2.xpose.msra.mxu0 0.0
    %1013 = vmatprep.subr.mxu0 0.0
    %1014 = vmatpush2.xpose.msra.mxu0 0.0
    %1015 = vmatprep.subr.mxu0 0.0
    %1016 = vmatpush2.xpose.msra.mxu0 0.0
    %1017 = vmatprep.subr.mxu0 0.0
    %1018 = vmatpush2.xpose.msra.mxu0 0.0
    %1019 = vmatprep.subr.mxu0 0.0
    %1020 = vmatpush2.xpose.msra.mxu0 0.0
    %1021 = vmatprep.subr.mxu0 0.0
    %1022 = vmatpush2.xpose.msra.mxu0 0.0
    %1023 = vmatprep.subr.mxu0 0.0
    %1024 = vmatpush2.xpose.msra.mxu0 0.0
    %1025 = vmatprep.subr.mxu0 0.0
    %1026 = vmatpush2.xpose.msra.mxu0 0.0
    %1027 = vmatprep.subr.mxu0 0.0
    %1028 = vmatpush2.xpose.msra.mxu0 0.0
    %1029 = vmatprep.mubr.f32.mxu0 0.0
    %1030 = vmatmul.mubr.f32.gmra.mxu0 %v959
    %v1031 = vpop.f32.mrf.mxu0
    %v1032 = vadd.f32 0.0, %v1031
    %v1033 = vpop.f32.mrf.mxu0
    %1034 = vdwg.mxu0
    %v1035 = vld [vmem:[#allocation3] sm:$0xff]
    %v1036 = vld [vmem:[#allocation4] sm:$0xff]
    %v1037 = vsel %vm445, %v1032, -inf
    %1038 = vmax.xlane.f32.xlu0 %v1037
    %v1039 = vpop.xlane.xlu0 %1038
    %v1040 = vmax.f32 %v1035, %v1039
    %v1041 = vsub.f32 %v1035, %v1040
    %v1042 = vmul.f32 %v1041, 1.442695
    %v1043 = vpow.pop %v1042
    %1045 = vset.pattern.permute.xlu0 3
    %1046 = vperm.xlu0 %1045, %v1040
    %v1047 = vpop.permute.xlu0 %1046
    %v1049 = vsub.f32 %v1032, %v1047
    %v1050 = vmul.f32 %v1049, 1.442695
    %v1051 = vpow.pop %v1050
    %v1052 = vmul.f32 %v1043, %v1036
    %v1053 = vsel %vm445, %v1051, 0.0
    %1054 = vadd.xlane.f32.xlu0 %v1053
    %v1055 = vpop.xlane.xlu0 %1054
    %v1056 = vadd.f32 %v1052, %v1055
    %vm1057 = vcmask 31768
    %1058 = vst.msk [vmem:[#allocation4] sm:$0xff] %vm1057, %v1056
    %v1059 = vld [vmem:[#allocation5] sm:$0xff]
    %1061 = vset.pattern.permute.xlu0 3
    %1062 = vperm.xlu0 %1061, %v1043
    %v1063 = vpop.permute.xlu0 %1062
    %v1065 = vmul.f32 %v1063, %v1059
    %1066 = vrot.lane.b32.xlu0 %v354, 104
    %v1067 = vpop.permute.xlu0 %1066
    %1068 = vrot.lane.b32.xlu0 %v359, 104
    %v1069 = vpop.permute.xlu0 %1068
    %v1073 = vsel %vm445, %v1051, 0
    %1075 = vmatprep.subr.mxu0 0.0
    %1076 = vmatpush1.msra.mxu0 0.0
    %1077 = vmatprep.subr.mxu0 0.0
    %1078 = vmatpush1.msra.mxu0 0.0
    %1079 = vmatprep.subr.mxu0 0.0
    %1080 = vmatpush1.msra.mxu0 0.0
    %1081 = vmatprep.subr.mxu0 0.0
    %1082 = vmatpush1.msra.mxu0 0.0
    %1083 = vmatprep.subr.mxu0 0.0
    %1084 = vmatpush1.msra.mxu0 0.0
    %1085 = vmatprep.subr.mxu0 0.0
    %1086 = vmatpush1.msra.mxu0 0.0
    %1087 = vmatprep.subr.mxu0 0.0
    %1088 = vmatpush1.msra.mxu0 0.0
    %1089 = vmatprep.subr.mxu0 0.0
    %1090 = vmatpush1.msra.mxu0 0.0
    %1091 = vmatprep.subr.mxu0 0.0
    %1092 = vmatpush1.msra.mxu0 0.0
    %1093 = vmatprep.subr.mxu0 0.0
    %1094 = vmatpush1.msra.mxu0 0.0
    %1095 = vmatprep.subr.mxu0 0.0
    %1096 = vmatpush1.msra.mxu0 0.0
    %1097 = vmatprep.subr.mxu0 0.0
    %1098 = vmatpush1.msra.mxu0 0.0
    %1099 = vmatprep.subr.mxu0 0.0
    %1100 = vmatpush1.msra.mxu0 0.0
    %1101 = vmatprep.subr.mxu0 0.0
    %1102 = vmatpush1.msra.mxu0 0.0
    %1103 = vmatprep.subr.mxu0 0.0
    %1104 = vmatpush1.msra.mxu0 %v1069
    %1105 = vmatprep.subr.mxu0 0.0
    %1106 = vmatpush1.msra.mxu0 %v1067
    %1107 = vmatprep.subr.mxu0 0.0
    %1108 = vmatpush2.msra.mxu0 0.0
    %1109 = vmatprep.subr.mxu0 0.0
    %1110 = vmatpush2.msra.mxu0 0.0
    %1111 = vmatprep.subr.mxu0 0.0
    %1112 = vmatpush2.msra.mxu0 0.0
    %1113 = vmatprep.subr.mxu0 0.0
    %1114 = vmatpush2.msra.mxu0 0.0
    %1115 = vmatprep.subr.mxu0 0.0
    %1116 = vmatpush2.msra.mxu0 0.0
    %1117 = vmatprep.subr.mxu0 0.0
    %1118 = vmatpush2.msra.mxu0 0.0
    %1119 = vmatprep.subr.mxu0 0.0
    %1120 = vmatpush2.msra.mxu0 0.0
    %1121 = vmatprep.subr.mxu0 0.0
    %1122 = vmatpush2.msra.mxu0 0.0
    %1123 = vmatprep.subr.mxu0 0.0
    %1124 = vmatpush2.msra.mxu0 0.0
    %1125 = vmatprep.subr.mxu0 0.0
    %1126 = vmatpush2.msra.mxu0 0.0
    %1127 = vmatprep.subr.mxu0 0.0
    %1128 = vmatpush2.msra.mxu0 0.0
    %1129 = vmatprep.subr.mxu0 0.0
    %1130 = vmatpush2.msra.mxu0 0.0
    %1131 = vmatprep.subr.mxu0 0.0
    %1132 = vmatpush2.msra.mxu0 0.0
    %1133 = vmatprep.subr.mxu0 0.0
    %1134 = vmatpush2.msra.mxu0 0.0
    %1135 = vmatprep.subr.mxu0 0.0
    %1136 = vmatpush2.msra.mxu0 0.0
    %1137 = vmatprep.subr.mxu0 0.0
    %1138 = vmatpush2.msra.mxu0 0.0
    %1139 = vmatprep.mubr.f32.mxu0 0.0
    %1140 = vmatmul.mubr.f32.gmra.mxu0 %v1073
    %v1141 = vpop.f32.mrf.mxu0
    %v1142 = vadd.f32 0.0, %v1141
    %v1143 = vpop.f32.mrf.mxu0
    %1144 = vdwg.mxu0
    %1146 = vrot.lane.b32.xlu0 %v1142, 24
    %v1147 = vpop.permute.xlu0 %1146
    %v1149 = vadd.f32 %v1065, %v1147
    %vm1150 = vcmask 261312
    %1151 = vst.msk [vmem:[#allocation5] sm:$0xff] %vm1150, %v1149
    %1152 = vst.msk [vmem:[#allocation3] sm:$0xff] %vm1057, %v1040
    // Predicated region
    $region58: #{tpu_custom_call.1} parent=1 // pred_check
      %p1153 = pneg %p107
    $region59: #{tpu_custom_call.1} parent=1 // pred_check_branch
      %1155 = sbr.rel (%p1153) target = $region61
    $region60: #{tpu_custom_call.1} parent=1 // pred_region
      %v1156 = vld [vmem:[#allocation4] sm:$0xff]
      %v1157 = vrcp.pop %v1156
      %v1158 = vld [vmem:[#allocation5] sm:$0xff]
      %1160 = vset.pattern.permute.xlu0 0
      %1161 = vperm.xlu0 %1160, %v1157
      %v1162 = vpop.permute.xlu0 %1161
      %v1164 = vmul.f32 %v1158, %v1162
      %1165 = vset.pattern.permute.xlu0 1
      %1166 = vperm.xlu0 %1165, %v1157
      %v1167 = vpop.permute.xlu0 %1166
      %v1169 = vmul.f32 %v1158, %v1167
      %1170 = vset.pattern.permute.xlu0 2
      %1171 = vperm.xlu0 %1170, %v1157
      %v1172 = vpop.permute.xlu0 %1171
      %v1174 = vmul.f32 %v1158, %v1172
      %1175 = vset.pattern.permute.xlu0 3
      %1176 = vperm.xlu0 %1175, %v1157
      %v1177 = vpop.permute.xlu0 %1176
      %v1179 = vmul.f32 %v1158, %v1177
      %v1180 = vsel %vm363, %v1164, %v1169
      %v1181 = vsel %vm445, %v1180, %v1174
      %vm1182 = vcmask 195584
      %v1183 = vsel %vm1182, %v1181, %v1179
      %v1184 = vld [vmem:[#allocation15] sm:$0xff]
      %v1185 = vld [vmem:[#allocation15 + $0x8] sm:$0xff]
      %v1186 = vld [vmem:[#allocation15 + $0x10] sm:$0xff]
      %v1187 = vld [vmem:[#allocation15 + $0x18] sm:$0xff]
      %v1188 = vld [vmem:[%s6] sm:$0x1]
      %v1190 = vlaneseq
      %v1191 = vshrl.u32 %v1190, 7
      %v1192 = vsub.s32 0, %v1191
      %v1193 = vrot.slane %v1188, %v1192
      %v1196 = vsel %vm201, %v1183, 0
      %1198 = vmatprep.subr.mxu0 0.0
      %1199 = vmatpush1.msra.mxu0 0.0
      %1200 = vmatprep.subr.mxu0 0.0
      %1201 = vmatpush1.msra.mxu0 0.0
      %1202 = vmatprep.subr.mxu0 0.0
      %1203 = vmatpush1.msra.mxu0 0.0
      %1204 = vmatprep.subr.mxu0 0.0
      %1205 = vmatpush1.msra.mxu0 0.0
      %1206 = vmatprep.subr.mxu0 0.0
      %1207 = vmatpush1.msra.mxu0 0.0
      %1208 = vmatprep.subr.mxu0 0.0
      %1209 = vmatpush1.msra.mxu0 0.0
      %1210 = vmatprep.subr.mxu0 0.0
      %1211 = vmatpush1.msra.mxu0 0.0
      %1212 = vmatprep.subr.mxu0 0.0
      %1213 = vmatpush1.msra.mxu0 0.0
      %1214 = vmatprep.subr.mxu0 0.0
      %1215 = vmatpush1.msra.mxu0 0.0
      %1216 = vmatprep.subr.mxu0 0.0
      %1217 = vmatpush1.msra.mxu0 0.0
      %1218 = vmatprep.subr.mxu0 0.0
      %1219 = vmatpush1.msra.mxu0 0.0
      %1220 = vmatprep.subr.mxu0 0.0
      %1221 = vmatpush1.msra.mxu0 0.0
      %1222 = vmatprep.subr.mxu0 0.0
      %1223 = vmatpush1.msra.mxu0 %v1187
      %1224 = vmatprep.subr.mxu0 0.0
      %1225 = vmatpush1.msra.mxu0 %v1186
      %1226 = vmatprep.subr.mxu0 0.0
      %1227 = vmatpush1.msra.mxu0 %v1185
      %1228 = vmatprep.subr.mxu0 0.0
      %1229 = vmatpush1.msra.mxu0 %v1184
      %1230 = vmatprep.subr.mxu0 0.0
      %1231 = vmatpush2.msra.mxu0 0.0
      %1232 = vmatprep.subr.mxu0 0.0
      %1233 = vmatpush2.msra.mxu0 0.0
      %1234 = vmatprep.subr.mxu0 0.0
      %1235 = vmatpush2.msra.mxu0 0.0
      %1236 = vmatprep.subr.mxu0 0.0
      %1237 = vmatpush2.msra.mxu0 0.0
      %1238 = vmatprep.subr.mxu0 0.0
      %1239 = vmatpush2.msra.mxu0 0.0
      %1240 = vmatprep.subr.mxu0 0.0
      %1241 = vmatpush2.msra.mxu0 0.0
      %1242 = vmatprep.subr.mxu0 0.0
      %1243 = vmatpush2.msra.mxu0 0.0
      %1244 = vmatprep.subr.mxu0 0.0
      %1245 = vmatpush2.msra.mxu0 0.0
      %1246 = vmatprep.subr.mxu0 0.0
      %1247 = vmatpush2.msra.mxu0 0.0
      %1248 = vmatprep.subr.mxu0 0.0
      %1249 = vmatpush2.msra.mxu0 0.0
      %1250 = vmatprep.subr.mxu0 0.0
      %1251 = vmatpush2.msra.mxu0 0.0
      %1252 = vmatprep.subr.mxu0 0.0
      %1253 = vmatpush2.msra.mxu0 0.0
      %1254 = vmatprep.subr.mxu0 0.0
      %1255 = vmatpush2.msra.mxu0 0.0
      %1256 = vmatprep.subr.mxu0 0.0
      %1257 = vmatpush2.msra.mxu0 0.0
      %1258 = vmatprep.subr.mxu0 0.0
      %1259 = vmatpush2.msra.mxu0 0.0
      %1260 = vmatprep.subr.mxu0 0.0
      %1261 = vmatpush2.msra.mxu0 0.0
      %1262 = vmatprep.mubr.f32.mxu0 0.0
      %1263 = vmatmul.mubr.f32.gmra.mxu0 %v1196
      %v1264 = vpop.f32.mrf.mxu0
      %v1265 = vadd.f32 %v1193, %v1264
      %v1266 = vpop.f32.mrf.mxu0
      %1267 = vdwg.mxu0
      %1268 = vst.msk [vmem:[#allocation17] sm:$0xff] %vm201, %v1265
    $region61: #{tpu_custom_call.1} parent=1 // pred_fallthru
      _
    // Predicated region
    $region62: #{tpu_custom_call.1} parent=1 // pred_check
      _
    $region63: #{tpu_custom_call.1} parent=1 // pred_check_branch
      %1270 = sbr.rel (0) target = $region65
    $region64: #{tpu_custom_call.1} parent=1 // pred_region
      %s1272 = ssub.s32 128, 128
      %1273 = vsyncadd [#allocation8], %s1272
      %s1275 = sshll.u32 [#allocation17], 4
      %s1276 = int_to_ptr.vmem [resolvable:$true] %s1275
      %1278 = dma.vmem_to_hbm [thread:$0]  %s1276, 128, %s7, [#allocation8]
    $region65: #{tpu_custom_call.1} parent=1 // pred_fallthru
      _
    // Predicated region
    $region66: #{tpu_custom_call.1} parent=1 // pred_check
      _
    $region67: #{tpu_custom_call.1} parent=1 // pred_check_branch
      %1280 = sbr.rel (0) target = $region69
    $region68: #{tpu_custom_call.1} parent=1 // pred_region
      %1281 = dma.done [#allocation8], 128
    $region69: #{tpu_custom_call.1} parent=1 // pred_fallthru
      _
    %1282 = vsyncpa [#allocation7], 1
    %1283 = vsyncpa [#allocation10], 1
    %1284 = vsyncpa [#allocation13], 1
    %1285 = vsyncpa [#allocation16], 1
    %1286 = vsyncpa [#allocation8], 1

</llo_original>
